<compile_context>
chip_gen: v7x
topology: tpu7x:2x2x1
jax: 0.10.0
libtpu: 0.0.40
codegen_flags: <defaults>
</compile_context>

<pallas_src>
import math
import functools

import jax
import jax.numpy as jnp
from jax.experimental import pallas as pl
from jax.experimental.pallas import tpu as pltpu


def _gelu_tanh(x):
    # "gelu_pytorch_tanh" activation used by Siglip.
    c = math.sqrt(2.0 / math.pi)
    return 0.5 * x * (1.0 + jnp.tanh(c * (x + 0.044715 * x * x * x)))


def _pool_head_kernel(eps,
                      x_ref,                      # (Bt, S, H)  f32 hidden-state tile
                      ws_ref, bs_ref,             # (H, nh) bf16, (1, nh) f32   folded score proj
                      wv_ref, bv_ref,             # (H, H) bf16,  (1, H)  f32   value proj
                      exp_ref,                    # (nh, H) bf16                head-expansion ones
                      wo_ref, bo_ref,             # (H, H) bf16,  (1, H)  f32   out proj
                      gamma_ref, beta_ref,        # (1, H) f32                  layernorm
                      w1_ref, b1_ref,             # (H, I) bf16,  (1, I)  f32   fc1
                      w2_ref, b2_ref,             # (I, H) bf16,  (1, H)  f32   fc2
                      o_ref):                     # (Bt, H) f32
    Bt, S, H = x_ref.shape
    nh = ws_ref.shape[1]

    x = x_ref[...].reshape(Bt * S, H)             # flatten batch tile for wide matmuls
    xb = x.astype(jnp.bfloat16)

    # --- attention scores: probe query already folded into ws/bs (wrapper) ---
    scores = jnp.dot(xb, ws_ref[...], preferred_element_type=jnp.float32) + bs_ref[...]
    scores = scores.reshape(Bt, S, nh)
    m = jnp.max(scores, axis=1, keepdims=True)
    e = jnp.exp(scores - m)
    inv_denom = pl.reciprocal(jnp.sum(e, axis=1, keepdims=True), approx=True)
    p = e * inv_denom                              # (Bt, S, nh) softmax over S per head

    # --- value projection + per-head weighted sum over S (all heads at once) ---
    v = jnp.dot(xb, wv_ref[...], preferred_element_type=jnp.float32) + bv_ref[...]    # (Bt*S, H)
    p_full = jnp.dot(p.reshape(Bt * S, nh).astype(jnp.bfloat16), exp_ref[...],
                     preferred_element_type=jnp.float32)                               # (Bt*S, H)
    attn = jnp.sum((p_full * v).reshape(Bt, S, H), axis=1)                             # (Bt, H)

    # --- output projection ---
    attn = jnp.dot(attn.astype(jnp.bfloat16), wo_ref[...],
                   preferred_element_type=jnp.float32) + bo_ref[...]                   # (Bt, H)

    # --- residual + layernorm + MLP (f32 math) ---
    residual = attn
    mu = jnp.mean(attn, axis=-1, keepdims=True)
    var = jnp.mean((attn - mu) ** 2, axis=-1, keepdims=True)
    ln = (attn - mu) * jax.lax.rsqrt(var + eps) * gamma_ref[...] + beta_ref[...]

    h1 = jnp.dot(ln.astype(jnp.bfloat16), w1_ref[...],
                 preferred_element_type=jnp.float32) + b1_ref[...]
    h1 = _gelu_tanh(h1)
    h2 = jnp.dot(h1.astype(jnp.bfloat16), w2_ref[...],
                 preferred_element_type=jnp.float32) + b2_ref[...]

    o_ref[...] = (residual + h2).astype(o_ref.dtype)


def siglip_attention_pooling_head(hidden_state, params, *, num_heads, eps=1e-6,
                                  batch_tile=8):
    B, S, H = hidden_state.shape
    nh = num_heads
    assert H % nh == 0
    hd = H // nh
    I = params["w1"].shape[1]
    Bt = min(batch_tile, B)
    grid_b = pl.cdiv(B, Bt)

    f32, bf16 = jnp.float32, jnp.bfloat16

    # ---- fold the batch-independent probe query into a (H, nh) score projection ----
    #   q = probe @ Wq + bq                                    (1, H)
    #   scores[:, h] = (x @ Wk + bk) . (q_h / sqrt(hd))   =>   scores = x @ W_score + b_score
    probe = params["probe"].astype(f32)
    q = probe @ params["wq"].astype(f32) + params["bq"].astype(f32)          # (1, H)
    scale = 1.0 / math.sqrt(hd)
    head_of = jnp.arange(H) // hd                                            # (H,)
    qbd = jnp.zeros((H, nh), f32).at[jnp.arange(H), head_of].set(q[0] * scale)
    w_score = (params["wk"].astype(f32) @ qbd).astype(bf16)                  # (H, nh)
    b_score = params["bk"].astype(f32) @ qbd                                 # (1, nh)

    # head-expansion matrix: (nh, H) block of ones replicating each head prob to hd lanes
    expand = (jnp.arange(nh)[:, None] == head_of[None, :]).astype(bf16)

    wv = params["wv"].astype(bf16); bv = params["bv"].astype(f32)
    wo = params["wo"].astype(bf16); bo = params["bo"].astype(f32)
    gamma = params["gamma"].astype(f32); beta = params["beta"].astype(f32)
    w1 = params["w1"].astype(bf16); b1 = params["b1"].astype(f32)
    w2 = params["w2"].astype(bf16); b2 = params["b2"].astype(f32)

    def resident(shape):
        # weights / biases: full block with a constant index map -> DMA'd once,
        # stays resident in VMEM across the whole batch grid.
        return pl.BlockSpec(shape, lambda b: (0,) * len(shape))

    in_specs = [
        pl.BlockSpec((Bt, S, H), lambda b: (b, 0, 0)),   # hidden_state batch tile
        resident((H, nh)), resident((1, nh)),            # folded score projection
        resident((H, H)), resident((1, H)),              # value projection
        resident((nh, H)),                               # head expansion
        resident((H, H)), resident((1, H)),              # output projection
        resident((1, H)), resident((1, H)),              # layernorm gamma, beta
        resident((H, I)), resident((1, I)),              # fc1
        resident((I, H)), resident((1, H)),              # fc2
    ]

    try:
        vmem_limit = int(pltpu.get_tpu_info().vmem_capacity_bytes * 0.75)
    except Exception:
        vmem_limit = None   # fall back to the compiler default

    out = pl.pallas_call(
        functools.partial(_pool_head_kernel, eps),
        out_shape=jax.ShapeDtypeStruct((B, H), jnp.float32),
        grid_spec=pltpu.PrefetchScalarGridSpec(
            num_scalar_prefetch=0,
            grid=(grid_b,),
            in_specs=in_specs,
            out_specs=pl.BlockSpec((Bt, H), lambda b: (b, 0)),
        ),
        compiler_params=pltpu.CompilerParams(
            dimension_semantics=("parallel",),
            vmem_limit_bytes=vmem_limit,
        ),
    )(
        hidden_state.astype(f32),
        w_score, b_score,
        wv, bv,
        expand,
        wo, bo,
        gamma, beta,
        w1, b1,
        w2, b2,
    )
    return out                # == hidden_state[:, 0] in the PyTorch module


def reference(hidden_state, p, *, num_heads, eps=1e-6):
    """Pure-JAX f32 reference mirroring torch.nn.MultiheadAttention + LayerNorm + SiglipMLP."""
    B, S, H = hidden_state.shape
    hd = H // num_heads
    probe = jnp.broadcast_to(p["probe"], (B, H))[:, None, :]
    q = probe @ p["wq"] + p["bq"]
    k = hidden_state @ p["wk"] + p["bk"]
    v = hidden_state @ p["wv"] + p["bv"]
    q = q.reshape(B, 1, num_heads, hd).transpose(0, 2, 1, 3)
    k = k.reshape(B, S, num_heads, hd).transpose(0, 2, 1, 3)
    v = v.reshape(B, S, num_heads, hd).transpose(0, 2, 1, 3)
    s = jnp.einsum("bhqd,bhkd->bhqk", q, k) / math.sqrt(hd)
    a = jax.nn.softmax(s, axis=-1)
    o = jnp.einsum("bhqk,bhkd->bhqd", a, v).transpose(0, 2, 1, 3).reshape(B, 1, H)
    o = o @ p["wo"] + p["bo"]
    res = o
    mu = o.mean(-1, keepdims=True)
    var = ((o - mu) ** 2).mean(-1, keepdims=True)
    ln = (o - mu) / jnp.sqrt(var + eps) * p["gamma"] + p["beta"]
    h1 = _gelu_tanh(ln @ p["w1"] + p["b1"])
    h2 = h1 @ p["w2"] + p["b2"]
    return (res + h2)[:, 0]


def make_params(key, H, I):
    ks = jax.random.split(key, 12)
    n = lambda k, shape, s=0.02: (s * jax.random.normal(k, shape)).astype(jnp.float32)
    # torch.nn.MultiheadAttention packs q/k/v into in_proj_weight (3H, H); we generate
    # the equivalent pre-transposed (H, H) blocks directly.
    return {
        "probe": jax.random.normal(ks[0], (1, H)).astype(jnp.float32),   # (1,1,H) squeezed
        "wq": n(ks[1], (H, H)), "wk": n(ks[2], (H, H)), "wv": n(ks[3], (H, H)),
        "bq": n(ks[4], (1, H)), "bk": n(ks[5], (1, H)), "bv": n(ks[6], (1, H)),
        "wo": n(ks[7], (H, H)), "bo": jnp.zeros((1, H), jnp.float32),
        "gamma": jnp.ones((1, H), jnp.float32), "beta": jnp.zeros((1, H), jnp.float32),
        "w1": n(ks[8], (H, I)), "b1": n(ks[9], (1, I)),
        "w2": n(ks[10], (I, H)), "b2": jnp.zeros((1, H), jnp.float32),
    }


if __name__ == "__main__":
    B, S, H, NH, I = 16, 16, 32, 4, 64
    eps = 1e-6
    key = jax.random.PRNGKey(0)
    k_x, k_p = jax.random.split(key)
    hidden_state = jax.random.normal(k_x, (B, S, H), dtype=jnp.float32)
    params = make_params(k_p, H, I)

    out = siglip_attention_pooling_head(hidden_state, params, num_heads=NH, eps=eps,
                                        batch_tile=8)
    out = jax.block_until_ready(out)

    ref = reference(hidden_state, params, num_heads=NH, eps=eps)
    assert out.shape == (B, H), out.shape
    # bf16 weights/activation-operands inside the kernel (f32 accumulation) -> loosened tol.
    max_err = float(jnp.max(jnp.abs(out - ref)))
    assert jnp.allclose(out, ref, atol=1e-2, rtol=1e-2), max_err
    print("KERNEL_OK")
</pallas_src>

<mosaic_0001>
module attributes {stable_mosaic.version = 11 : i64} {
  func.func @_pool_head_kernel(%arg0: i32, %arg1: memref<8x16x32xf32, #tpu.memory_space<vmem>>, %arg2: memref<32x4xbf16, #tpu.memory_space<vmem>>, %arg3: memref<1x4xf32, #tpu.memory_space<vmem>>, %arg4: memref<32x32xbf16, #tpu.memory_space<vmem>>, %arg5: memref<1x32xf32, #tpu.memory_space<vmem>>, %arg6: memref<4x32xbf16, #tpu.memory_space<vmem>>, %arg7: memref<32x32xbf16, #tpu.memory_space<vmem>>, %arg8: memref<1x32xf32, #tpu.memory_space<vmem>>, %arg9: memref<1x32xf32, #tpu.memory_space<vmem>>, %arg10: memref<1x32xf32, #tpu.memory_space<vmem>>, %arg11: memref<32x64xbf16, #tpu.memory_space<vmem>>, %arg12: memref<1x64xf32, #tpu.memory_space<vmem>>, %arg13: memref<64x32xbf16, #tpu.memory_space<vmem>>, %arg14: memref<1x32xf32, #tpu.memory_space<vmem>>, %arg15: memref<8x32xf32, #tpu.memory_space<vmem>>) attributes {dimension_semantics = [#tpu.dimension_semantics<parallel>], iteration_bounds = array<i64: 2>, scalar_prefetch = 0 : i64, scratch_operands = 0 : i64, tpu.core_type = #tpu.core_type<tc>, window_params = [{transform_indices = @transform_0, window_bounds = array<i64: 8, 16, 32>}, {pipeline_mode = #tpu.pipeline_mode<synchronous>, transform_indices = @transform_1, window_bounds = array<i64: 32, 4>}, {pipeline_mode = #tpu.pipeline_mode<synchronous>, transform_indices = @transform_2, window_bounds = array<i64: 1, 4>}, {pipeline_mode = #tpu.pipeline_mode<synchronous>, transform_indices = @transform_3, window_bounds = array<i64: 32, 32>}, {pipeline_mode = #tpu.pipeline_mode<synchronous>, transform_indices = @transform_4, window_bounds = array<i64: 1, 32>}, {pipeline_mode = #tpu.pipeline_mode<synchronous>, transform_indices = @transform_5, window_bounds = array<i64: 4, 32>}, {pipeline_mode = #tpu.pipeline_mode<synchronous>, transform_indices = @transform_6, window_bounds = array<i64: 32, 32>}, {pipeline_mode = #tpu.pipeline_mode<synchronous>, transform_indices = @transform_7, window_bounds = array<i64: 1, 32>}, {pipeline_mode = #tpu.pipeline_mode<synchronous>, transform_indices = @transform_8, window_bounds = array<i64: 1, 32>}, {pipeline_mode = #tpu.pipeline_mode<synchronous>, transform_indices = @transform_9, window_bounds = array<i64: 1, 32>}, {pipeline_mode = #tpu.pipeline_mode<synchronous>, transform_indices = @transform_10, window_bounds = array<i64: 32, 64>}, {pipeline_mode = #tpu.pipeline_mode<synchronous>, transform_indices = @transform_11, window_bounds = array<i64: 1, 64>}, {pipeline_mode = #tpu.pipeline_mode<synchronous>, transform_indices = @transform_12, window_bounds = array<i64: 64, 32>}, {pipeline_mode = #tpu.pipeline_mode<synchronous>, transform_indices = @transform_13, window_bounds = array<i64: 1, 32>}, {transform_indices = @transform_14, window_bounds = array<i64: 8, 32>}]} {
    %c0 = arith.constant 0 : index
    %c0_0 = arith.constant 0 : index
    %c0_1 = arith.constant 0 : index
    %0 = vector.load %arg1[%c0, %c0_0, %c0_1] : memref<8x16x32xf32, #tpu.memory_space<vmem>>, vector<8x16x32xf32>
    %1 = vector.shape_cast %0 : vector<8x16x32xf32> to vector<128x32xf32>
    %2 = arith.truncf %1 : vector<128x32xf32> to vector<128x32xbf16>
    %c0_2 = arith.constant 0 : index
    %c0_3 = arith.constant 0 : index
    %3 = vector.load %arg2[%c0_2, %c0_3] : memref<32x4xbf16, #tpu.memory_space<vmem>>, vector<32x4xbf16>
    %cst = arith.constant dense<0.000000e+00> : vector<128x4xf32>
    %4 = tpu.matmul %2, %3, %cst {dimension_numbers = #tpu.dot_dimension_numbers<[1], [0], [0], [1], [0, 0, 1, 1], [], []>} : vector<128x32xbf16>, vector<32x4xbf16>, vector<128x4xf32> -> vector<128x4xf32>
    %c0_4 = arith.constant 0 : index
    %c0_5 = arith.constant 0 : index
    %5 = vector.load %arg3[%c0_4, %c0_5] : memref<1x4xf32, #tpu.memory_space<vmem>>, vector<1x4xf32>
    %6 = vector.broadcast %5 : vector<1x4xf32> to vector<128x4xf32>
    %7 = arith.addf %4, %6 : vector<128x4xf32>
    %8 = vector.shape_cast %7 : vector<128x4xf32> to vector<8x16x4xf32>
    %cst_6 = arith.constant dense<0xFF800000> : vector<8x4xf32>
    %9 = vector.multi_reduction <maximumf>, %8, %cst_6 [1] : vector<8x16x4xf32> to vector<8x4xf32>
    %10 = vector.shape_cast %9 : vector<8x4xf32> to vector<8x1x4xf32>
    %11 = vector.broadcast %10 : vector<8x1x4xf32> to vector<8x16x4xf32>
    %12 = arith.subf %8, %11 : vector<8x16x4xf32>
    %13 = math.exp %12 : vector<8x16x4xf32>
    %cst_7 = arith.constant dense<0.000000e+00> : vector<8x4xf32>
    %14 = vector.multi_reduction <add>, %13, %cst_7 [1] : vector<8x16x4xf32> to vector<8x4xf32>
    %15 = vector.shape_cast %14 : vector<8x4xf32> to vector<8x1x4xf32>
    %16 = tpu.reciprocal %15 {approx = true} : vector<8x1x4xf32> -> vector<8x1x4xf32>
    %17 = vector.broadcast %16 : vector<8x1x4xf32> to vector<8x16x4xf32>
    %18 = arith.mulf %13, %17 : vector<8x16x4xf32>
    %c0_8 = arith.constant 0 : index
    %c0_9 = arith.constant 0 : index
    %19 = vector.load %arg4[%c0_8, %c0_9] : memref<32x32xbf16, #tpu.memory_space<vmem>>, vector<32x32xbf16>
    %cst_10 = arith.constant dense<0.000000e+00> : vector<128x32xf32>
    %20 = tpu.matmul %2, %19, %cst_10 {dimension_numbers = #tpu.dot_dimension_numbers<[1], [0], [0], [1], [0, 0, 1, 1], [], []>} : vector<128x32xbf16>, vector<32x32xbf16>, vector<128x32xf32> -> vector<128x32xf32>
    %c0_11 = arith.constant 0 : index
    %c0_12 = arith.constant 0 : index
    %21 = vector.load %arg5[%c0_11, %c0_12] : memref<1x32xf32, #tpu.memory_space<vmem>>, vector<1x32xf32>
    %22 = vector.broadcast %21 : vector<1x32xf32> to vector<128x32xf32>
    %23 = arith.addf %20, %22 : vector<128x32xf32>
    %24 = vector.shape_cast %18 : vector<8x16x4xf32> to vector<128x4xf32>
    %25 = arith.truncf %24 : vector<128x4xf32> to vector<128x4xbf16>
    %c0_13 = arith.constant 0 : index
    %c0_14 = arith.constant 0 : index
    %26 = vector.load %arg6[%c0_13, %c0_14] : memref<4x32xbf16, #tpu.memory_space<vmem>>, vector<4x32xbf16>
    %cst_15 = arith.constant dense<0.000000e+00> : vector<128x32xf32>
    %27 = tpu.matmul %25, %26, %cst_15 {dimension_numbers = #tpu.dot_dimension_numbers<[1], [0], [0], [1], [0, 0, 1, 1], [], []>} : vector<128x4xbf16>, vector<4x32xbf16>, vector<128x32xf32> -> vector<128x32xf32>
    %28 = arith.mulf %27, %23 : vector<128x32xf32>
    %29 = vector.shape_cast %28 : vector<128x32xf32> to vector<8x16x32xf32>
    %cst_16 = arith.constant dense<0.000000e+00> : vector<8x32xf32>
    %30 = vector.multi_reduction <add>, %29, %cst_16 [1] : vector<8x16x32xf32> to vector<8x32xf32>
    %31 = arith.truncf %30 : vector<8x32xf32> to vector<8x32xbf16>
    %c0_17 = arith.constant 0 : index
    %c0_18 = arith.constant 0 : index
    %32 = vector.load %arg7[%c0_17, %c0_18] : memref<32x32xbf16, #tpu.memory_space<vmem>>, vector<32x32xbf16>
    %cst_19 = arith.constant dense<0.000000e+00> : vector<8x32xf32>
    %33 = tpu.matmul %31, %32, %cst_19 {dimension_numbers = #tpu.dot_dimension_numbers<[1], [0], [0], [1], [0, 0, 1, 1], [], []>} : vector<8x32xbf16>, vector<32x32xbf16>, vector<8x32xf32> -> vector<8x32xf32>
    %c0_20 = arith.constant 0 : index
    %c0_21 = arith.constant 0 : index
    %34 = vector.load %arg8[%c0_20, %c0_21] : memref<1x32xf32, #tpu.memory_space<vmem>>, vector<1x32xf32>
    %35 = vector.broadcast %34 : vector<1x32xf32> to vector<8x32xf32>
    %36 = arith.addf %33, %35 : vector<8x32xf32>
    %cst_22 = arith.constant dense<0.000000e+00> : vector<8xf32>
    %37 = vector.multi_reduction <add>, %36, %cst_22 [1] : vector<8x32xf32> to vector<8xf32>
    %38 = vector.shape_cast %37 : vector<8xf32> to vector<8x1xf32>
    %cst_23 = arith.constant 3.200000e+01 : f32
    %39 = vector.broadcast %cst_23 : f32 to vector<8x1xf32>
    %40 = arith.divf %38, %39 : vector<8x1xf32>
    %41 = vector.broadcast %40 : vector<8x1xf32> to vector<8x32xf32>
    %42 = arith.subf %36, %41 : vector<8x32xf32>
    %43 = arith.mulf %42, %42 : vector<8x32xf32>
    %cst_24 = arith.constant dense<0.000000e+00> : vector<8xf32>
    %44 = vector.multi_reduction <add>, %43, %cst_24 [1] : vector<8x32xf32> to vector<8xf32>
    %45 = vector.shape_cast %44 : vector<8xf32> to vector<8x1xf32>
    %cst_25 = arith.constant 3.200000e+01 : f32
    %46 = vector.broadcast %cst_25 : f32 to vector<8x1xf32>
    %47 = arith.divf %45, %46 : vector<8x1xf32>
    %48 = vector.broadcast %40 : vector<8x1xf32> to vector<8x32xf32>
    %49 = arith.subf %36, %48 : vector<8x32xf32>
    %cst_26 = arith.constant 9.99999997E-7 : f32
    %50 = vector.broadcast %cst_26 : f32 to vector<8x1xf32>
    %51 = arith.addf %47, %50 : vector<8x1xf32>
    %52 = math.rsqrt %51 : vector<8x1xf32>
    %53 = vector.broadcast %52 : vector<8x1xf32> to vector<8x32xf32>
    %54 = arith.mulf %49, %53 : vector<8x32xf32>
    %c0_27 = arith.constant 0 : index
    %c0_28 = arith.constant 0 : index
    %55 = vector.load %arg9[%c0_27, %c0_28] : memref<1x32xf32, #tpu.memory_space<vmem>>, vector<1x32xf32>
    %56 = vector.broadcast %55 : vector<1x32xf32> to vector<8x32xf32>
    %57 = arith.mulf %54, %56 : vector<8x32xf32>
    %c0_29 = arith.constant 0 : index
    %c0_30 = arith.constant 0 : index
    %58 = vector.load %arg10[%c0_29, %c0_30] : memref<1x32xf32, #tpu.memory_space<vmem>>, vector<1x32xf32>
    %59 = vector.broadcast %58 : vector<1x32xf32> to vector<8x32xf32>
    %60 = arith.addf %57, %59 : vector<8x32xf32>
    %61 = arith.truncf %60 : vector<8x32xf32> to vector<8x32xbf16>
    %c0_31 = arith.constant 0 : index
    %c0_32 = arith.constant 0 : index
    %62 = vector.load %arg11[%c0_31, %c0_32] : memref<32x64xbf16, #tpu.memory_space<vmem>>, vector<32x64xbf16>
    %cst_33 = arith.constant dense<0.000000e+00> : vector<8x64xf32>
    %63 = tpu.matmul %61, %62, %cst_33 {dimension_numbers = #tpu.dot_dimension_numbers<[1], [0], [0], [1], [0, 0, 1, 1], [], []>} : vector<8x32xbf16>, vector<32x64xbf16>, vector<8x64xf32> -> vector<8x64xf32>
    %c0_34 = arith.constant 0 : index
    %c0_35 = arith.constant 0 : index
    %64 = vector.load %arg12[%c0_34, %c0_35] : memref<1x64xf32, #tpu.memory_space<vmem>>, vector<1x64xf32>
    %65 = vector.broadcast %64 : vector<1x64xf32> to vector<8x64xf32>
    %66 = arith.addf %63, %65 : vector<8x64xf32>
    %cst_36 = arith.constant 5.000000e-01 : f32
    %67 = vector.broadcast %cst_36 : f32 to vector<8x64xf32>
    %68 = arith.mulf %67, %66 : vector<8x64xf32>
    %cst_37 = arith.constant 4.471500e-02 : f32
    %69 = vector.broadcast %cst_37 : f32 to vector<8x64xf32>
    %70 = arith.mulf %69, %66 : vector<8x64xf32>
    %71 = arith.mulf %70, %66 : vector<8x64xf32>
    %72 = arith.mulf %71, %66 : vector<8x64xf32>
    %73 = arith.addf %66, %72 : vector<8x64xf32>
    %cst_38 = arith.constant 0.797884583 : f32
    %74 = vector.broadcast %cst_38 : f32 to vector<8x64xf32>
    %75 = arith.mulf %74, %73 : vector<8x64xf32>
    %76 = math.tanh %75 : vector<8x64xf32>
    %cst_39 = arith.constant 1.000000e+00 : f32
    %77 = vector.broadcast %cst_39 : f32 to vector<8x64xf32>
    %78 = arith.addf %77, %76 : vector<8x64xf32>
    %79 = arith.mulf %68, %78 : vector<8x64xf32>
    %80 = arith.truncf %79 : vector<8x64xf32> to vector<8x64xbf16>
    %c0_40 = arith.constant 0 : index
    %c0_41 = arith.constant 0 : index
    %81 = vector.load %arg13[%c0_40, %c0_41] : memref<64x32xbf16, #tpu.memory_space<vmem>>, vector<64x32xbf16>
    %cst_42 = arith.constant dense<0.000000e+00> : vector<8x32xf32>
    %82 = tpu.matmul %80, %81, %cst_42 {dimension_numbers = #tpu.dot_dimension_numbers<[1], [0], [0], [1], [0, 0, 1, 1], [], []>} : vector<8x64xbf16>, vector<64x32xbf16>, vector<8x32xf32> -> vector<8x32xf32>
    %c0_43 = arith.constant 0 : index
    %c0_44 = arith.constant 0 : index
    %83 = vector.load %arg14[%c0_43, %c0_44] : memref<1x32xf32, #tpu.memory_space<vmem>>, vector<1x32xf32>
    %84 = vector.broadcast %83 : vector<1x32xf32> to vector<8x32xf32>
    %85 = arith.addf %82, %84 : vector<8x32xf32>
    %86 = arith.addf %36, %85 : vector<8x32xf32>
    %c0_45 = arith.constant 0 : index
    %c0_46 = arith.constant 0 : index
    %87 = vector.load %arg15[%c0_45, %c0_46] : memref<8x32xf32, #tpu.memory_space<vmem>>, vector<8x32xf32>
    tpu.vector_store %arg15[%c0_45, %c0_46], %86 {strides = array<i32>} : memref<8x32xf32, #tpu.memory_space<vmem>>, vector<8x32xf32>,
    return
  }
  func.func @transform_0(%arg0: i32) -> (i32, i32, i32) {
    %c0_i32 = arith.constant 0 : i32
    %c0_i32_0 = arith.constant 0 : i32
    %c0_i32_1 = arith.constant 0 : i32
    return %arg0, %c0_i32, %c0_i32_0 : i32, i32, i32
  }
  func.func @transform_1(%arg0: i32) -> (i32, i32) {
    %c0_i32 = arith.constant 0 : i32
    %c0_i32_0 = arith.constant 0 : i32
    %c0_i32_1 = arith.constant 0 : i32
    return %c0_i32, %c0_i32_0 : i32, i32
  }
  func.func @transform_2(%arg0: i32) -> (i32, i32) {
    %c0_i32 = arith.constant 0 : i32
    %c0_i32_0 = arith.constant 0 : i32
    %c0_i32_1 = arith.constant 0 : i32
    return %c0_i32, %c0_i32_0 : i32, i32
  }
  func.func @transform_3(%arg0: i32) -> (i32, i32) {
    %c0_i32 = arith.constant 0 : i32
    %c0_i32_0 = arith.constant 0 : i32
    %c0_i32_1 = arith.constant 0 : i32
    return %c0_i32, %c0_i32_0 : i32, i32
  }
  func.func @transform_4(%arg0: i32) -> (i32, i32) {
    %c0_i32 = arith.constant 0 : i32
    %c0_i32_0 = arith.constant 0 : i32
    %c0_i32_1 = arith.constant 0 : i32
    return %c0_i32, %c0_i32_0 : i32, i32
  }
  func.func @transform_5(%arg0: i32) -> (i32, i32) {
    %c0_i32 = arith.constant 0 : i32
    %c0_i32_0 = arith.constant 0 : i32
    %c0_i32_1 = arith.constant 0 : i32
    return %c0_i32, %c0_i32_0 : i32, i32
  }
  func.func @transform_6(%arg0: i32) -> (i32, i32) {
    %c0_i32 = arith.constant 0 : i32
    %c0_i32_0 = arith.constant 0 : i32
    %c0_i32_1 = arith.constant 0 : i32
    return %c0_i32, %c0_i32_0 : i32, i32
  }
  func.func @transform_7(%arg0: i32) -> (i32, i32) {
    %c0_i32 = arith.constant 0 : i32
    %c0_i32_0 = arith.constant 0 : i32
    %c0_i32_1 = arith.constant 0 : i32
    return %c0_i32, %c0_i32_0 : i32, i32
  }
  func.func @transform_8(%arg0: i32) -> (i32, i32) {
    %c0_i32 = arith.constant 0 : i32
    %c0_i32_0 = arith.constant 0 : i32
    %c0_i32_1 = arith.constant 0 : i32
    return %c0_i32, %c0_i32_0 : i32, i32
  }
  func.func @transform_9(%arg0: i32) -> (i32, i32) {
    %c0_i32 = arith.constant 0 : i32
    %c0_i32_0 = arith.constant 0 : i32
    %c0_i32_1 = arith.constant 0 : i32
    return %c0_i32, %c0_i32_0 : i32, i32
  }
  func.func @transform_10(%arg0: i32) -> (i32, i32) {
    %c0_i32 = arith.constant 0 : i32
    %c0_i32_0 = arith.constant 0 : i32
    %c0_i32_1 = arith.constant 0 : i32
    return %c0_i32, %c0_i32_0 : i32, i32
  }
  func.func @transform_11(%arg0: i32) -> (i32, i32) {
    %c0_i32 = arith.constant 0 : i32
    %c0_i32_0 = arith.constant 0 : i32
    %c0_i32_1 = arith.constant 0 : i32
    return %c0_i32, %c0_i32_0 : i32, i32
  }
  func.func @transform_12(%arg0: i32) -> (i32, i32) {
    %c0_i32 = arith.constant 0 : i32
    %c0_i32_0 = arith.constant 0 : i32
    %c0_i32_1 = arith.constant 0 : i32
    return %c0_i32, %c0_i32_0 : i32, i32
  }
  func.func @transform_13(%arg0: i32) -> (i32, i32) {
    %c0_i32 = arith.constant 0 : i32
    %c0_i32_0 = arith.constant 0 : i32
    %c0_i32_1 = arith.constant 0 : i32
    return %c0_i32, %c0_i32_0 : i32, i32
  }
  func.func @transform_14(%arg0: i32) -> (i32, i32) {
    %c0_i32 = arith.constant 0 : i32
    %c0_i32_0 = arith.constant 0 : i32
    return %arg0, %c0_i32 : i32, i32
  }
}

</mosaic_0001>

<llo_original>
// kernel: tpu_custom_call.1
$region0: #{tpu_custom_call.1}
  #allocation0 [shape = 'u32[]', space=smem, size = 0x4, offset = 0x4, fixed_abs, tag = 'smem constant byte address 0x4 - core index']
  #allocation1 [shape = 'u32[144,128]{1,0:T(1,128)}', space=vmem, size = 0x12000, scoped, tag = 'internal scratch']
  %s0 = inlined_call_operand.hbm [shape: f32[16,16,32], index: 0, kind: input, shape index: {}]
  %s1 = inlined_call_operand.vmem [shape: bf16[32,4], index: 1, kind: input, shape index: {}]
  %s2 = inlined_call_operand.vmem [shape: f32[1,4], index: 2, kind: input, shape index: {}]
  %s3 = inlined_call_operand.vmem [shape: bf16[32,32], index: 3, kind: input, shape index: {}]
  %s4 = inlined_call_operand.vmem [shape: f32[1,32], index: 4, kind: input, shape index: {}]
  %s5 = inlined_call_operand.vmem [shape: bf16[4,32], index: 5, kind: input, shape index: {}]
  %s6 = inlined_call_operand.vmem [shape: bf16[32,32], index: 6, kind: input, shape index: {}]
  %s7 = inlined_call_operand.vmem [shape: f32[1,32], index: 7, kind: input, shape index: {}]
  %s8 = inlined_call_operand.vmem [shape: f32[1,32], index: 8, kind: input, shape index: {}]
  %s9 = inlined_call_operand.vmem [shape: f32[1,32], index: 9, kind: input, shape index: {}]
  %s10 = inlined_call_operand.vmem [shape: bf16[32,64], index: 10, kind: input, shape index: {}]
  %s11 = inlined_call_operand.vmem [shape: f32[1,64], index: 11, kind: input, shape index: {}]
  %s12 = inlined_call_operand.vmem [shape: bf16[64,32], index: 12, kind: input, shape index: {}]
  %s13 = inlined_call_operand.vmem [shape: f32[1,32], index: 13, kind: input, shape index: {}]
  %s14 = inlined_call_operand.hbm [shape: f32[16,32], index: 14, kind: output, shape index: {}]
  %s15 = sld [smem:[#allocation0]]
  $region93: #{tpu_custom_call.1} parent=0
    _
  %s17 = ssub.s32 1, %s15
  %s18 = scalar_select 0, %s17, %s15
  $region1: #{tpu_custom_call.1} parent=0
    #allocation2 [shape = 'u8[131072]{0}', space=vmem, size = 0x20000, scoped, tag = 'input window, operand 0']
    #allocation3 [shape = 's32[2]{0}', space=sflag, size = 0x8, scoped, tag = 'scoped memory for tpu_custom_call.1']
    #allocation4 [shape = 's32[2]{0}', space=sflag, size = 0x8, scoped, tag = 'scoped memory for tpu_custom_call.1']
    #allocation5 [shape = 'u8[8192]{0}', space=vmem, size = 0x2000, scoped, tag = 'output window, operand 0']
    %19 = vsyncpa [#allocation3], 0
    %s20 = scalar_lea.sflag [#allocation3], 1
    %21 = vsyncpa %s20, 0
    %22 = vsyncpa [#allocation4], 0
    %s23 = scalar_lea.sflag [#allocation4], 1
    %24 = vsyncpa %s23, 0
    loop: start=0, step=1, limit=4
    $region2: #{tpu_custom_call.1} parent=1 // loop_pre_header
      _
    $region3: #{tpu_custom_call.1} parent=1 // loop_header
      %s26 = sphi 0, %s30
      %p27 = scmp.ge.s32.totalorder %s26, 4
      %s36 = sphi 0, %s38
      %s39 = sphi 0, %s36
      %s40 = sphi 0, %s39
      %s56 = sphi 0, %s40
      %s60 = sphi 0, %s60
      %s62 = sphi 0, %s60
      %s63 = sphi 0, %s62
      %s77 = sphi 0, %s63
      %s81 = sphi 0, %s81
      %s83 = sphi 0, %s81
      %s84 = sphi 0, %s83
      %s98 = sphi 0, %s84
      %s102 = sphi 0, %s102
      %s104 = sphi 0, %s102
      %s105 = sphi 0, %s104
      %s119 = sphi 0, %s105
      %s123 = sphi 0, %s123
      %s125 = sphi 0, %s123
      %s126 = sphi 0, %s125
      %s140 = sphi 0, %s126
      %s144 = sphi 0, %s144
      %s146 = sphi 0, %s144
      %s147 = sphi 0, %s146
      %s161 = sphi 0, %s147
      %s165 = sphi 0, %s165
      %s167 = sphi 0, %s165
      %s168 = sphi 0, %s167
      %s182 = sphi 0, %s168
      %s186 = sphi 0, %s186
      %s188 = sphi 0, %s186
      %s189 = sphi 0, %s188
      %s203 = sphi 0, %s189
      %s207 = sphi 0, %s207
      %s209 = sphi 0, %s207
      %s210 = sphi 0, %s209
      %s224 = sphi 0, %s210
      %s228 = sphi 0, %s228
      %s230 = sphi 0, %s228
      %s231 = sphi 0, %s230
      %s245 = sphi 0, %s231
      %s249 = sphi 0, %s249
      %s251 = sphi 0, %s249
      %s252 = sphi 0, %s251
      %s266 = sphi 0, %s252
      %s270 = sphi 0, %s270
      %s272 = sphi 0, %s270
      %s273 = sphi 0, %s272
      %s287 = sphi 0, %s273
      %s291 = sphi 0, %s291
      %s293 = sphi 0, %s291
      %s294 = sphi 0, %s293
      %s308 = sphi 0, %s294
      %s312 = sphi 0, %s312
      %s314 = sphi 0, %s312
      %s315 = sphi 0, %s314
      %s329 = sphi 0, %s315
      %s335 = sphi 0, %s337
      %s338 = sphi 0, %s335
      %s339 = sphi 0, %s338
      %s355 = sphi 0, %s339
    $region4: #{tpu_custom_call.1} parent=1 // loop_header_branch
      %29 = sbr.rel (%p27) target = $region8
    $region5: #{tpu_custom_call.1} parent=1 // loop_body
      %s31 = ssub.s32 %s26, 1
      %s32 = ssub.s32 %s26, 2
      %s33 = sadd.s32 %s26, 1
      %s34 = ssub.s32 %s26, %s33
      %p35 = scmp.eq.s32.totalorder %s34, 0
      %s37 = sadd.s32 %s36, 1
      %s38 = scalar_select %p35, %s36, %s37
      %p41 = pneg %p35
      %p42 = scmp.eq.s32.totalorder %s26, 1
      %p43 = por %p41, %p42
      %p44 = scmp.ne.s32.totalorder %s36, %s39
      %p45 = scmp.eq.s32.totalorder %s26, 0
      %p46 = por %p44, %p45
      %p47 = scmp.ne.s32.totalorder %s36, %s39
      %p48 = scmp.eq.s32.totalorder %s31, 1
      %p49 = por %p47, %p48
      %p50 = scmp.ne.s32.totalorder %s39, %s40
      %p51 = scmp.eq.s32.totalorder %s31, 0
      %p52 = por %p50, %p51
      %p53 = scmp.ne.s32.totalorder %s39, %s40
      %p54 = scmp.eq.s32.totalorder %s32, 1
      %p55 = por %p53, %p54
      %p57 = scmp.ne.s32.totalorder %s40, %s56
      %p58 = scmp.eq.s32.totalorder %s32, 0
      %p59 = por %p57, %p58
      %s61 = sadd.s32 %s60, 1
      %p64 = scmp.eq.s32.totalorder %s26, 1
      %p65 = scmp.ne.s32.totalorder %s60, %s62
      %p66 = scmp.eq.s32.totalorder %s26, 0
      %p67 = por %p65, %p66
      %p68 = scmp.ne.s32.totalorder %s60, %s62
      %p69 = scmp.eq.s32.totalorder %s31, 1
      %p70 = por %p68, %p69
      %p71 = scmp.ne.s32.totalorder %s62, %s63
      %p72 = scmp.eq.s32.totalorder %s31, 0
      %p73 = por %p71, %p72
      %p74 = scmp.ne.s32.totalorder %s62, %s63
      %p75 = scmp.eq.s32.totalorder %s32, 1
      %p76 = por %p74, %p75
      %p78 = scmp.ne.s32.totalorder %s63, %s77
      %p79 = scmp.eq.s32.totalorder %s32, 0
      %p80 = por %p78, %p79
      %s82 = sadd.s32 %s81, 1
      %p85 = scmp.eq.s32.totalorder %s26, 1
      %p86 = scmp.ne.s32.totalorder %s81, %s83
      %p87 = scmp.eq.s32.totalorder %s26, 0
      %p88 = por %p86, %p87
      %p89 = scmp.ne.s32.totalorder %s81, %s83
      %p90 = scmp.eq.s32.totalorder %s31, 1
      %p91 = por %p89, %p90
      %p92 = scmp.ne.s32.totalorder %s83, %s84
      %p93 = scmp.eq.s32.totalorder %s31, 0
      %p94 = por %p92, %p93
      %p95 = scmp.ne.s32.totalorder %s83, %s84
      %p96 = scmp.eq.s32.totalorder %s32, 1
      %p97 = por %p95, %p96
      %p99 = scmp.ne.s32.totalorder %s84, %s98
      %p100 = scmp.eq.s32.totalorder %s32, 0
      %p101 = por %p99, %p100
      %s103 = sadd.s32 %s102, 1
      %p106 = scmp.eq.s32.totalorder %s26, 1
      %p107 = scmp.ne.s32.totalorder %s102, %s104
      %p108 = scmp.eq.s32.totalorder %s26, 0
      %p109 = por %p107, %p108
      %p110 = scmp.ne.s32.totalorder %s102, %s104
      %p111 = scmp.eq.s32.totalorder %s31, 1
      %p112 = por %p110, %p111
      %p113 = scmp.ne.s32.totalorder %s104, %s105
      %p114 = scmp.eq.s32.totalorder %s31, 0
      %p115 = por %p113, %p114
      %p116 = scmp.ne.s32.totalorder %s104, %s105
      %p117 = scmp.eq.s32.totalorder %s32, 1
      %p118 = por %p116, %p117
      %p120 = scmp.ne.s32.totalorder %s105, %s119
      %p121 = scmp.eq.s32.totalorder %s32, 0
      %p122 = por %p120, %p121
      %s124 = sadd.s32 %s123, 1
      %p127 = scmp.eq.s32.totalorder %s26, 1
      %p128 = scmp.ne.s32.totalorder %s123, %s125
      %p129 = scmp.eq.s32.totalorder %s26, 0
      %p130 = por %p128, %p129
      %p131 = scmp.ne.s32.totalorder %s123, %s125
      %p132 = scmp.eq.s32.totalorder %s31, 1
      %p133 = por %p131, %p132
      %p134 = scmp.ne.s32.totalorder %s125, %s126
      %p135 = scmp.eq.s32.totalorder %s31, 0
      %p136 = por %p134, %p135
      %p137 = scmp.ne.s32.totalorder %s125, %s126
      %p138 = scmp.eq.s32.totalorder %s32, 1
      %p139 = por %p137, %p138
      %p141 = scmp.ne.s32.totalorder %s126, %s140
      %p142 = scmp.eq.s32.totalorder %s32, 0
      %p143 = por %p141, %p142
      %s145 = sadd.s32 %s144, 1
      %p148 = scmp.eq.s32.totalorder %s26, 1
      %p149 = scmp.ne.s32.totalorder %s144, %s146
      %p150 = scmp.eq.s32.totalorder %s26, 0
      %p151 = por %p149, %p150
      %p152 = scmp.ne.s32.totalorder %s144, %s146
      %p153 = scmp.eq.s32.totalorder %s31, 1
      %p154 = por %p152, %p153
      %p155 = scmp.ne.s32.totalorder %s146, %s147
      %p156 = scmp.eq.s32.totalorder %s31, 0
      %p157 = por %p155, %p156
      %p158 = scmp.ne.s32.totalorder %s146, %s147
      %p159 = scmp.eq.s32.totalorder %s32, 1
      %p160 = por %p158, %p159
      %p162 = scmp.ne.s32.totalorder %s147, %s161
      %p163 = scmp.eq.s32.totalorder %s32, 0
      %p164 = por %p162, %p163
      %s166 = sadd.s32 %s165, 1
      %p169 = scmp.eq.s32.totalorder %s26, 1
      %p170 = scmp.ne.s32.totalorder %s165, %s167
      %p171 = scmp.eq.s32.totalorder %s26, 0
      %p172 = por %p170, %p171
      %p173 = scmp.ne.s32.totalorder %s165, %s167
      %p174 = scmp.eq.s32.totalorder %s31, 1
      %p175 = por %p173, %p174
      %p176 = scmp.ne.s32.totalorder %s167, %s168
      %p177 = scmp.eq.s32.totalorder %s31, 0
      %p178 = por %p176, %p177
      %p179 = scmp.ne.s32.totalorder %s167, %s168
      %p180 = scmp.eq.s32.totalorder %s32, 1
      %p181 = por %p179, %p180
      %p183 = scmp.ne.s32.totalorder %s168, %s182
      %p184 = scmp.eq.s32.totalorder %s32, 0
      %p185 = por %p183, %p184
      %s187 = sadd.s32 %s186, 1
      %p190 = scmp.eq.s32.totalorder %s26, 1
      %p191 = scmp.ne.s32.totalorder %s186, %s188
      %p192 = scmp.eq.s32.totalorder %s26, 0
      %p193 = por %p191, %p192
      %p194 = scmp.ne.s32.totalorder %s186, %s188
      %p195 = scmp.eq.s32.totalorder %s31, 1
      %p196 = por %p194, %p195
      %p197 = scmp.ne.s32.totalorder %s188, %s189
      %p198 = scmp.eq.s32.totalorder %s31, 0
      %p199 = por %p197, %p198
      %p200 = scmp.ne.s32.totalorder %s188, %s189
      %p201 = scmp.eq.s32.totalorder %s32, 1
      %p202 = por %p200, %p201
      %p204 = scmp.ne.s32.totalorder %s189, %s203
      %p205 = scmp.eq.s32.totalorder %s32, 0
      %p206 = por %p204, %p205
      %s208 = sadd.s32 %s207, 1
      %p211 = scmp.eq.s32.totalorder %s26, 1
      %p212 = scmp.ne.s32.totalorder %s207, %s209
      %p213 = scmp.eq.s32.totalorder %s26, 0
      %p214 = por %p212, %p213
      %p215 = scmp.ne.s32.totalorder %s207, %s209
      %p216 = scmp.eq.s32.totalorder %s31, 1
      %p217 = por %p215, %p216
      %p218 = scmp.ne.s32.totalorder %s209, %s210
      %p219 = scmp.eq.s32.totalorder %s31, 0
      %p220 = por %p218, %p219
      %p221 = scmp.ne.s32.totalorder %s209, %s210
      %p222 = scmp.eq.s32.totalorder %s32, 1
      %p223 = por %p221, %p222
      %p225 = scmp.ne.s32.totalorder %s210, %s224
      %p226 = scmp.eq.s32.totalorder %s32, 0
      %p227 = por %p225, %p226
      %s229 = sadd.s32 %s228, 1
      %p232 = scmp.eq.s32.totalorder %s26, 1
      %p233 = scmp.ne.s32.totalorder %s228, %s230
      %p234 = scmp.eq.s32.totalorder %s26, 0
      %p235 = por %p233, %p234
      %p236 = scmp.ne.s32.totalorder %s228, %s230
      %p237 = scmp.eq.s32.totalorder %s31, 1
      %p238 = por %p236, %p237
      %p239 = scmp.ne.s32.totalorder %s230, %s231
      %p240 = scmp.eq.s32.totalorder %s31, 0
      %p241 = por %p239, %p240
      %p242 = scmp.ne.s32.totalorder %s230, %s231
      %p243 = scmp.eq.s32.totalorder %s32, 1
      %p244 = por %p242, %p243
      %p246 = scmp.ne.s32.totalorder %s231, %s245
      %p247 = scmp.eq.s32.totalorder %s32, 0
      %p248 = por %p246, %p247
      %s250 = sadd.s32 %s249, 1
      %p253 = scmp.eq.s32.totalorder %s26, 1
      %p254 = scmp.ne.s32.totalorder %s249, %s251
      %p255 = scmp.eq.s32.totalorder %s26, 0
      %p256 = por %p254, %p255
      %p257 = scmp.ne.s32.totalorder %s249, %s251
      %p258 = scmp.eq.s32.totalorder %s31, 1
      %p259 = por %p257, %p258
      %p260 = scmp.ne.s32.totalorder %s251, %s252
      %p261 = scmp.eq.s32.totalorder %s31, 0
      %p262 = por %p260, %p261
      %p263 = scmp.ne.s32.totalorder %s251, %s252
      %p264 = scmp.eq.s32.totalorder %s32, 1
      %p265 = por %p263, %p264
      %p267 = scmp.ne.s32.totalorder %s252, %s266
      %p268 = scmp.eq.s32.totalorder %s32, 0
      %p269 = por %p267, %p268
      %s271 = sadd.s32 %s270, 1
      %p274 = scmp.eq.s32.totalorder %s26, 1
      %p275 = scmp.ne.s32.totalorder %s270, %s272
      %p276 = scmp.eq.s32.totalorder %s26, 0
      %p277 = por %p275, %p276
      %p278 = scmp.ne.s32.totalorder %s270, %s272
      %p279 = scmp.eq.s32.totalorder %s31, 1
      %p280 = por %p278, %p279
      %p281 = scmp.ne.s32.totalorder %s272, %s273
      %p282 = scmp.eq.s32.totalorder %s31, 0
      %p283 = por %p281, %p282
      %p284 = scmp.ne.s32.totalorder %s272, %s273
      %p285 = scmp.eq.s32.totalorder %s32, 1
      %p286 = por %p284, %p285
      %p288 = scmp.ne.s32.totalorder %s273, %s287
      %p289 = scmp.eq.s32.totalorder %s32, 0
      %p290 = por %p288, %p289
      %s292 = sadd.s32 %s291, 1
      %p295 = scmp.eq.s32.totalorder %s26, 1
      %p296 = scmp.ne.s32.totalorder %s291, %s293
      %p297 = scmp.eq.s32.totalorder %s26, 0
      %p298 = por %p296, %p297
      %p299 = scmp.ne.s32.totalorder %s291, %s293
      %p300 = scmp.eq.s32.totalorder %s31, 1
      %p301 = por %p299, %p300
      %p302 = scmp.ne.s32.totalorder %s293, %s294
      %p303 = scmp.eq.s32.totalorder %s31, 0
      %p304 = por %p302, %p303
      %p305 = scmp.ne.s32.totalorder %s293, %s294
      %p306 = scmp.eq.s32.totalorder %s32, 1
      %p307 = por %p305, %p306
      %p309 = scmp.ne.s32.totalorder %s294, %s308
      %p310 = scmp.eq.s32.totalorder %s32, 0
      %p311 = por %p309, %p310
      %s313 = sadd.s32 %s312, 1
      %p316 = scmp.eq.s32.totalorder %s26, 1
      %p317 = scmp.ne.s32.totalorder %s312, %s314
      %p318 = scmp.eq.s32.totalorder %s26, 0
      %p319 = por %p317, %p318
      %p320 = scmp.ne.s32.totalorder %s312, %s314
      %p321 = scmp.eq.s32.totalorder %s31, 1
      %p322 = por %p320, %p321
      %p323 = scmp.ne.s32.totalorder %s314, %s315
      %p324 = scmp.eq.s32.totalorder %s31, 0
      %p325 = por %p323, %p324
      %p326 = scmp.ne.s32.totalorder %s314, %s315
      %p327 = scmp.eq.s32.totalorder %s32, 1
      %p328 = por %p326, %p327
      %p330 = scmp.ne.s32.totalorder %s315, %s329
      %p331 = scmp.eq.s32.totalorder %s32, 0
      %p332 = por %p330, %p331
      %s333 = ssub.s32 %s26, %s33
      %p334 = scmp.eq.s32.totalorder %s333, 0
      %s336 = sadd.s32 %s335, 1
      %s337 = scalar_select %p334, %s335, %s336
      %p340 = pneg %p334
      %p341 = scmp.eq.s32.totalorder %s26, 1
      %p342 = por %p340, %p341
      %p343 = scmp.ne.s32.totalorder %s335, %s338
      %p344 = scmp.eq.s32.totalorder %s26, 0
      %p345 = por %p343, %p344
      %p346 = scmp.ne.s32.totalorder %s335, %s338
      %p347 = scmp.eq.s32.totalorder %s31, 1
      %p348 = por %p346, %p347
      %p349 = scmp.ne.s32.totalorder %s338, %s339
      %p350 = scmp.eq.s32.totalorder %s31, 0
      %p351 = por %p349, %p350
      %p352 = scmp.ne.s32.totalorder %s338, %s339
      %p353 = scmp.eq.s32.totalorder %s32, 1
      %p354 = por %p352, %p353
      %p356 = scmp.ne.s32.totalorder %s339, %s355
      %p357 = scmp.eq.s32.totalorder %s32, 0
      %p358 = por %p356, %p357
      %p359 = scmp.le.s32.totalorder 1, %s26
      %p360 = scmp.lt.s32.totalorder %s26, 3
      %p361 = pnand %p359, %p360
      %p362 = pneg %p361
      // Predicated region
      $region9: #{tpu_custom_call.1} parent=5 // pred_check
        _
      $region10: #{tpu_custom_call.1} parent=5 // pred_check_branch
        %364 = sbr.rel (%p361) target = $region12
      $region11: #{tpu_custom_call.1} parent=5 // pred_region
        %s365 = ssub.s32 %s26, 1
        // Predicated region
        $region13: #{tpu_custom_call.1} parent=11 // pred_check
          %p366 = pneg %p73
        $region14: #{tpu_custom_call.1} parent=11 // pred_check_branch
          %368 = sbr.rel (%p366) target = $region16
        $region15: #{tpu_custom_call.1} parent=11 // pred_region
          _
        $region16: #{tpu_custom_call.1} parent=11 // pred_fallthru
          _
        // Predicated region
        $region17: #{tpu_custom_call.1} parent=11 // pred_check
          %p369 = pneg %p94
        $region18: #{tpu_custom_call.1} parent=11 // pred_check_branch
          %371 = sbr.rel (%p369) target = $region20
        $region19: #{tpu_custom_call.1} parent=11 // pred_region
          _
        $region20: #{tpu_custom_call.1} parent=11 // pred_fallthru
          _
        // Predicated region
        $region21: #{tpu_custom_call.1} parent=11 // pred_check
          %p372 = pneg %p115
        $region22: #{tpu_custom_call.1} parent=11 // pred_check_branch
          %374 = sbr.rel (%p372) target = $region24
        $region23: #{tpu_custom_call.1} parent=11 // pred_region
          _
        $region24: #{tpu_custom_call.1} parent=11 // pred_fallthru
          _
        // Predicated region
        $region25: #{tpu_custom_call.1} parent=11 // pred_check
          %p375 = pneg %p136
        $region26: #{tpu_custom_call.1} parent=11 // pred_check_branch
          %377 = sbr.rel (%p375) target = $region28
        $region27: #{tpu_custom_call.1} parent=11 // pred_region
          _
        $region28: #{tpu_custom_call.1} parent=11 // pred_fallthru
          _
        // Predicated region
        $region29: #{tpu_custom_call.1} parent=11 // pred_check
          %p378 = pneg %p157
        $region30: #{tpu_custom_call.1} parent=11 // pred_check_branch
          %380 = sbr.rel (%p378) target = $region32
        $region31: #{tpu_custom_call.1} parent=11 // pred_region
          _
        $region32: #{tpu_custom_call.1} parent=11 // pred_fallthru
          _
        // Predicated region
        $region33: #{tpu_custom_call.1} parent=11 // pred_check
          %p381 = pneg %p178
        $region34: #{tpu_custom_call.1} parent=11 // pred_check_branch
          %383 = sbr.rel (%p381) target = $region36
        $region35: #{tpu_custom_call.1} parent=11 // pred_region
          _
        $region36: #{tpu_custom_call.1} parent=11 // pred_fallthru
          _
        // Predicated region
        $region37: #{tpu_custom_call.1} parent=11 // pred_check
          %p384 = pneg %p199
        $region38: #{tpu_custom_call.1} parent=11 // pred_check_branch
          %386 = sbr.rel (%p384) target = $region40
        $region39: #{tpu_custom_call.1} parent=11 // pred_region
          _
        $region40: #{tpu_custom_call.1} parent=11 // pred_fallthru
          _
        // Predicated region
        $region41: #{tpu_custom_call.1} parent=11 // pred_check
          %p387 = pneg %p220
        $region42: #{tpu_custom_call.1} parent=11 // pred_check_branch
          %389 = sbr.rel (%p387) target = $region44
        $region43: #{tpu_custom_call.1} parent=11 // pred_region
          _
        $region44: #{tpu_custom_call.1} parent=11 // pred_fallthru
          _
        // Predicated region
        $region45: #{tpu_custom_call.1} parent=11 // pred_check
          %p390 = pneg %p241
        $region46: #{tpu_custom_call.1} parent=11 // pred_check_branch
          %392 = sbr.rel (%p390) target = $region48
        $region47: #{tpu_custom_call.1} parent=11 // pred_region
          _
        $region48: #{tpu_custom_call.1} parent=11 // pred_fallthru
          _
        // Predicated region
        $region49: #{tpu_custom_call.1} parent=11 // pred_check
          %p393 = pneg %p262
        $region50: #{tpu_custom_call.1} parent=11 // pred_check_branch
          %395 = sbr.rel (%p393) target = $region52
        $region51: #{tpu_custom_call.1} parent=11 // pred_region
          _
        $region52: #{tpu_custom_call.1} parent=11 // pred_fallthru
          _
        // Predicated region
        $region53: #{tpu_custom_call.1} parent=11 // pred_check
          %p396 = pneg %p283
        $region54: #{tpu_custom_call.1} parent=11 // pred_check_branch
          %398 = sbr.rel (%p396) target = $region56
        $region55: #{tpu_custom_call.1} parent=11 // pred_region
          _
        $region56: #{tpu_custom_call.1} parent=11 // pred_fallthru
          _
        // Predicated region
        $region57: #{tpu_custom_call.1} parent=11 // pred_check
          %p399 = pneg %p304
        $region58: #{tpu_custom_call.1} parent=11 // pred_check_branch
          %401 = sbr.rel (%p399) target = $region60
        $region59: #{tpu_custom_call.1} parent=11 // pred_region
          _
        $region60: #{tpu_custom_call.1} parent=11 // pred_fallthru
          _
        // Predicated region
        $region61: #{tpu_custom_call.1} parent=11 // pred_check
          %p402 = pneg %p325
        $region62: #{tpu_custom_call.1} parent=11 // pred_check_branch
          %404 = sbr.rel (%p402) target = $region64
        $region63: #{tpu_custom_call.1} parent=11 // pred_region
          _
        $region64: #{tpu_custom_call.1} parent=11 // pred_fallthru
          _
      $region12: #{tpu_custom_call.1} parent=5 // pred_fallthru
        _
      %p405 = scmp.lt.s32.totalorder %s26, 2
      // Predicated region
      $region65: #{tpu_custom_call.1} parent=5 // pred_check
        %p406 = pneg %p405
      $region66: #{tpu_custom_call.1} parent=5 // pred_check_branch
        %408 = sbr.rel (%p406) target = $region68
      $region67: #{tpu_custom_call.1} parent=5 // pred_region
        // Predicated region
        $region69: #{tpu_custom_call.1} parent=67 // pred_check
          %p409 = pneg %p46
        $region70: #{tpu_custom_call.1} parent=67 // pred_check_branch
          %411 = sbr.rel (%p409) target = $region72
        $region71: #{tpu_custom_call.1} parent=67 // pred_region
          %s412 = sand.u32 %s36, 1
          %s413 = scalar_lea.sflag [#allocation3], %s412
          %s414 = sand.u32 %s36, 1
          %s415 = smul.addr %s414, 128
          %s416 = scalar_lea.vmem [#allocation2], %s415
          %s417 = smul.u32 8, %s26
          %s419 = ssub.s32 2048, 2048
          %420 = vsyncadd %s413, %s419
          %s421 = smul.addr %s417, 2
          %s422 = smul.addr %s421, 128
          %s423 = scalar_lea.hbm %s0, %s422
          %s424 = sshll.u32 %s416, 4
          %s425 = int_to_ptr.vmem [resolvable:$true] %s424
          %430 = dma.hbm_to_vmem [thread:$0]  %s423, 2048, %s425, %s413, 128, 128, 8
        $region72: #{tpu_custom_call.1} parent=67 // pred_fallthru
          _
      $region68: #{tpu_custom_call.1} parent=5 // pred_fallthru
        _
      %p431 = scmp.le.s32.totalorder 1, %s26
      %p432 = scmp.lt.s32.totalorder %s26, 3
      %p433 = pnand %p431, %p432
      %p434 = pneg %p433
      // Predicated region
      $region73: #{tpu_custom_call.1} parent=5 // pred_check
        _
      $region74: #{tpu_custom_call.1} parent=5 // pred_check_branch
        %436 = sbr.rel (%p433) target = $region76
      $region75: #{tpu_custom_call.1} parent=5 // pred_region
        %s437 = ssub.s32 %s26, 1
        %s438 = sand.u32 %s39, 1
        %s439 = scalar_lea.sflag [#allocation3], %s438
        %s440 = sand.u32 %s39, 1
        %s441 = smul.addr %s440, 128
        %s442 = scalar_lea.vmem [#allocation2], %s441
        // Predicated region
        $region77: #{tpu_custom_call.1} parent=75 // pred_check
          %p443 = pneg %p52
        $region78: #{tpu_custom_call.1} parent=75 // pred_check_branch
          %445 = sbr.rel (%p443) target = $region80
        $region79: #{tpu_custom_call.1} parent=75 // pred_region
          %446 = dma.done %s439, 2048
        $region80: #{tpu_custom_call.1} parent=75 // pred_fallthru
          _
        %s447 = sand.u32 %s39, 1
        %s448 = scalar_lea.sflag [#allocation3], %s447
        %s449 = sand.u32 %s39, 1
        %s450 = smul.addr %s449, 128
        %s451 = scalar_lea.vmem [#allocation2], %s450
        %p452 = pneg %p52
        %p453 = pneg %p49
        %p454 = pneg %p73
        %p455 = pneg %p70
        %p456 = pneg %p94
        %p457 = pneg %p91
        %p458 = pneg %p115
        %p459 = pneg %p112
        %p460 = pneg %p136
        %p461 = pneg %p133
        %p462 = pneg %p157
        %p463 = pneg %p154
        %p464 = pneg %p178
        %p465 = pneg %p175
        %p466 = pneg %p199
        %p467 = pneg %p196
        %p468 = pneg %p220
        %p469 = pneg %p217
        %p470 = pneg %p241
        %p471 = pneg %p238
        %p472 = pneg %p262
        %p473 = pneg %p259
        %p474 = pneg %p283
        %p475 = pneg %p280
        %p476 = pneg %p304
        %p477 = pneg %p301
        %p478 = pneg %p325
        %p479 = pneg %p322
        %p480 = pneg %p351
        %p481 = pneg %p348
        %s482 = sand.u32 %s338, 1
        %s483 = scalar_lea.sflag [#allocation4], %s482
        %s484 = sand.u32 %s338, 1
        %s485 = smul.addr %s484, 8
        %s486 = scalar_lea.vmem [#allocation5], %s485
        %s487 = smul.u32 8, %s31
        %v489 = vld [vmem:[%s442] sm:$0xff]
        %v490 = vld [vmem:[%s442 + $0x8] sm:$0xff]
        %v491 = vld [vmem:[%s442 + $0x10] sm:$0xff]
        %v492 = vld [vmem:[%s442 + $0x18] sm:$0xff]
        %v493 = vld [vmem:[%s442 + $0x20] sm:$0xff]
        %v494 = vld [vmem:[%s442 + $0x28] sm:$0xff]
        %v495 = vld [vmem:[%s442 + $0x30] sm:$0xff]
        %v496 = vld [vmem:[%s442 + $0x38] sm:$0xff]
        %v497 = vld [vmem:[%s442 + $0x40] sm:$0xff]
        %v498 = vld [vmem:[%s442 + $0x48] sm:$0xff]
        %v499 = vld [vmem:[%s442 + $0x50] sm:$0xff]
        %v500 = vld [vmem:[%s442 + $0x58] sm:$0xff]
        %v501 = vld [vmem:[%s442 + $0x60] sm:$0xff]
        %v502 = vld [vmem:[%s442 + $0x68] sm:$0xff]
        %v503 = vld [vmem:[%s442 + $0x70] sm:$0xff]
        %v504 = vld [vmem:[%s442 + $0x78] sm:$0xff]
        %v505 = vpack.c.bf16 %v490, %v489
        %v506 = vpack.c.bf16 %v492, %v491
        %v507 = vpack.c.bf16 %v494, %v493
        %v508 = vpack.c.bf16 %v496, %v495
        %v509 = vpack.c.bf16 %v498, %v497
        %v510 = vpack.c.bf16 %v500, %v499
        %v511 = vpack.c.bf16 %v502, %v501
        %v512 = vpack.c.bf16 %v504, %v503
        %v513 = vld [vmem:[%s1] sm:$0xf]
        %v514 = vld [vmem:[%s1 + $0x4] sm:$0xf]
        %v515 = vld [vmem:[%s1 + $0x8] sm:$0xf]
        %v516 = vld [vmem:[%s1 + $0xc] sm:$0xf]
        %v517 = vld [vmem:[%s2] sm:$0x1]
        %v519 = vlaneseq
        %v520 = vshrl.u32 %v519, 7
        %v521 = vsub.s32 0, %v520
        %v522 = vrot.slane %v517, %v521
        %v528 = vunpack.c.l.b16 %v513
        %v529 = vunpack.c.l.b16 %v514
        %v530 = vunpack.c.l.b16 %v515
        %v531 = vunpack.c.l.b16 %v516
        %v532 = vpack.c.b16 %v529, %v528
        %v533 = vpack.c.b16 %v531, %v530
        %vm536 = vcmask 261120
        %v538 = vsel %vm536, %v505, 0
        %v541 = vsel %vm536, %v506, 0
        %v544 = vsel %vm536, %v507, 0
        %v547 = vsel %vm536, %v508, 0
        %v550 = vsel %vm536, %v509, 0
        %v553 = vsel %vm536, %v510, 0
        %v556 = vsel %vm536, %v511, 0
        %v559 = vsel %vm536, %v512, 0
        %561 = vmatprep.subr.bf16.mxu0 0
        %562 = vmatpush1.bf16.msra.mxu0 %v532
        %563 = vmatprep.subr.bf16.mxu0 0
        %564 = vmatpush1.bf16.msra.mxu0 %v533
        %565 = vmatprep.subr.bf16.mxu0 0
        %566 = vmatpush1.bf16.msra.mxu0 0
        %567 = vmatprep.subr.bf16.mxu0 0
        %568 = vmatpush1.bf16.msra.mxu0 0
        %569 = vmatprep.subr.bf16.mxu0 0
        %570 = vmatpush1.bf16.msra.mxu0 0
        %571 = vmatprep.subr.bf16.mxu0 0
        %572 = vmatpush1.bf16.msra.mxu0 0
        %573 = vmatprep.subr.bf16.mxu0 0
        %574 = vmatpush1.bf16.msra.mxu0 0
        %575 = vmatprep.subr.bf16.mxu0 0
        %576 = vmatpush1.bf16.msra.mxu0 0
        %577 = vmatprep.subr.bf16.mxu0 0
        %578 = vmatpush1.bf16.msra.mxu0 0
        %579 = vmatprep.subr.bf16.mxu0 0
        %580 = vmatpush1.bf16.msra.mxu0 0
        %581 = vmatprep.subr.bf16.mxu0 0
        %582 = vmatpush1.bf16.msra.mxu0 0
        %583 = vmatprep.subr.bf16.mxu0 0
        %584 = vmatpush1.bf16.msra.mxu0 0
        %585 = vmatprep.subr.bf16.mxu0 0
        %586 = vmatpush1.bf16.msra.mxu0 0
        %587 = vmatprep.subr.bf16.mxu0 0
        %588 = vmatpush1.bf16.msra.mxu0 0
        %589 = vmatprep.subr.bf16.mxu0 0
        %590 = vmatpush1.bf16.msra.mxu0 0
        %591 = vmatprep.subr.bf16.mxu0 0
        %592 = vmatpush1.bf16.msra.mxu0 0
        %593 = vmatprep.mubr.bf16.mxu0 0
        %594 = vmatmul.mubr.bf16.gmra.mrb[0].mxu0 %v538
        %v595 = vpop.f32.mrb[0].mxu0
        %v596 = vadd.f32 %v522, %v595
        %v597 = vpop.f32.mrb[0].mxu0
        %v598 = vpop.f32.mrb[0].mxu0
        %v599 = vadd.f32 %v522, %v598
        %v600 = vpop.f32.mrb[0].mxu0
        %601 = vmatprep.mubr.bf16.mxu0 0
        %602 = vmatmul.mubr.bf16.gmra.mrb[0].mxu0 %v541
        %v603 = vpop.f32.mrb[0].mxu0
        %v604 = vadd.f32 %v522, %v603
        %v605 = vpop.f32.mrb[0].mxu0
        %v606 = vpop.f32.mrb[0].mxu0
        %v607 = vadd.f32 %v522, %v606
        %v608 = vpop.f32.mrb[0].mxu0
        %609 = vmatprep.mubr.bf16.mxu0 0
        %610 = vmatmul.mubr.bf16.gmra.mrb[0].mxu0 %v544
        %v611 = vpop.f32.mrb[0].mxu0
        %v612 = vadd.f32 %v522, %v611
        %v613 = vpop.f32.mrb[0].mxu0
        %v614 = vpop.f32.mrb[0].mxu0
        %v615 = vadd.f32 %v522, %v614
        %v616 = vpop.f32.mrb[0].mxu0
        %617 = vmatprep.mubr.bf16.mxu0 0
        %618 = vmatmul.mubr.bf16.gmra.mrb[0].mxu0 %v547
        %v619 = vpop.f32.mrb[0].mxu0
        %v620 = vadd.f32 %v522, %v619
        %v621 = vpop.f32.mrb[0].mxu0
        %v622 = vpop.f32.mrb[0].mxu0
        %v623 = vadd.f32 %v522, %v622
        %v624 = vpop.f32.mrb[0].mxu0
        %625 = vmatprep.mubr.bf16.mxu0 0
        %626 = vmatmul.mubr.bf16.gmra.mrb[0].mxu0 %v550
        %v627 = vpop.f32.mrb[0].mxu0
        %v628 = vadd.f32 %v522, %v627
        %v629 = vpop.f32.mrb[0].mxu0
        %v630 = vpop.f32.mrb[0].mxu0
        %v631 = vadd.f32 %v522, %v630
        %v632 = vpop.f32.mrb[0].mxu0
        %633 = vmatprep.mubr.bf16.mxu0 0
        %634 = vmatmul.mubr.bf16.gmra.mrb[0].mxu0 %v553
        %v635 = vpop.f32.mrb[0].mxu0
        %v636 = vadd.f32 %v522, %v635
        %v637 = vpop.f32.mrb[0].mxu0
        %v638 = vpop.f32.mrb[0].mxu0
        %v639 = vadd.f32 %v522, %v638
        %v640 = vpop.f32.mrb[0].mxu0
        %641 = vmatprep.mubr.bf16.mxu0 0
        %642 = vmatmul.mubr.bf16.gmra.mrb[0].mxu0 %v556
        %v643 = vpop.f32.mrb[0].mxu0
        %v644 = vadd.f32 %v522, %v643
        %v645 = vpop.f32.mrb[0].mxu0
        %v646 = vpop.f32.mrb[0].mxu0
        %v647 = vadd.f32 %v522, %v646
        %v648 = vpop.f32.mrb[0].mxu0
        %649 = vmatprep.mubr.bf16.mxu0 0
        %650 = vmatmul.mubr.bf16.gmra.mrb[0].mxu0 %v559
        %v651 = vpop.f32.mrb[0].mxu0
        %v652 = vadd.f32 %v522, %v651
        %v653 = vpop.f32.mrb[0].mxu0
        %v654 = vpop.f32.mrb[0].mxu0
        %v655 = vadd.f32 %v522, %v654
        %v656 = vpop.f32.mrb[0].mxu0
        %657 = vdwg.mxu0
        %vm658 = vcmask 31744
        %v659 = vsel %vm658, %v596, -inf
        %v660 = vsel %vm658, %v599, -inf
        %v661 = vmax.f32 %v659, %v660
        %v662 = vrot.slane %v661, 4
        %v663 = vmax.f32 %v661, %v662
        %v664 = vrot.slane %v663, 2
        %v665 = vmax.f32 %v663, %v664
        %v666 = vrot.slane %v665, 1
        %v667 = vmax.f32 %v665, %v666
        %v668 = vsel %vm658, %v604, -inf
        %v669 = vsel %vm658, %v607, -inf
        %v670 = vmax.f32 %v668, %v669
        %v671 = vrot.slane %v670, 4
        %v672 = vmax.f32 %v670, %v671
        %v673 = vrot.slane %v672, 2
        %v674 = vmax.f32 %v672, %v673
        %v675 = vrot.slane %v674, 1
        %v676 = vmax.f32 %v674, %v675
        %v677 = vsel %vm658, %v612, -inf
        %v678 = vsel %vm658, %v615, -inf
        %v679 = vmax.f32 %v677, %v678
        %v680 = vrot.slane %v679, 4
        %v681 = vmax.f32 %v679, %v680
        %v682 = vrot.slane %v681, 2
        %v683 = vmax.f32 %v681, %v682
        %v684 = vrot.slane %v683, 1
        %v685 = vmax.f32 %v683, %v684
        %v686 = vsel %vm658, %v620, -inf
        %v687 = vsel %vm658, %v623, -inf
        %v688 = vmax.f32 %v686, %v687
        %v689 = vrot.slane %v688, 4
        %v690 = vmax.f32 %v688, %v689
        %v691 = vrot.slane %v690, 2
        %v692 = vmax.f32 %v690, %v691
        %v693 = vrot.slane %v692, 1
        %v694 = vmax.f32 %v692, %v693
        %v695 = vsel %vm658, %v628, -inf
        %v696 = vsel %vm658, %v631, -inf
        %v697 = vmax.f32 %v695, %v696
        %v698 = vrot.slane %v697, 4
        %v699 = vmax.f32 %v697, %v698
        %v700 = vrot.slane %v699, 2
        %v701 = vmax.f32 %v699, %v700
        %v702 = vrot.slane %v701, 1
        %v703 = vmax.f32 %v701, %v702
        %v704 = vsel %vm658, %v636, -inf
        %v705 = vsel %vm658, %v639, -inf
        %v706 = vmax.f32 %v704, %v705
        %v707 = vrot.slane %v706, 4
        %v708 = vmax.f32 %v706, %v707
        %v709 = vrot.slane %v708, 2
        %v710 = vmax.f32 %v708, %v709
        %v711 = vrot.slane %v710, 1
        %v712 = vmax.f32 %v710, %v711
        %v713 = vsel %vm658, %v644, -inf
        %v714 = vsel %vm658, %v647, -inf
        %v715 = vmax.f32 %v713, %v714
        %v716 = vrot.slane %v715, 4
        %v717 = vmax.f32 %v715, %v716
        %v718 = vrot.slane %v717, 2
        %v719 = vmax.f32 %v717, %v718
        %v720 = vrot.slane %v719, 1
        %v721 = vmax.f32 %v719, %v720
        %v722 = vsel %vm658, %v652, -inf
        %v723 = vsel %vm658, %v655, -inf
        %v724 = vmax.f32 %v722, %v723
        %v725 = vrot.slane %v724, 4
        %v726 = vmax.f32 %v724, %v725
        %v727 = vrot.slane %v726, 2
        %v728 = vmax.f32 %v726, %v727
        %v729 = vrot.slane %v728, 1
        %v730 = vmax.f32 %v728, %v729
        %v731 = vsub.f32 %v596, %v667
        %v732 = vsub.f32 %v599, %v667
        %v733 = vsub.f32 %v604, %v676
        %v734 = vsub.f32 %v607, %v676
        %v735 = vsub.f32 %v612, %v685
        %v736 = vsub.f32 %v615, %v685
        %v737 = vsub.f32 %v620, %v694
        %v738 = vsub.f32 %v623, %v694
        %v739 = vsub.f32 %v628, %v703
        %v740 = vsub.f32 %v631, %v703
        %v741 = vsub.f32 %v636, %v712
        %v742 = vsub.f32 %v639, %v712
        %v743 = vsub.f32 %v644, %v721
        %v744 = vsub.f32 %v647, %v721
        %v745 = vsub.f32 %v652, %v730
        %v746 = vsub.f32 %v655, %v730
        %v747 = vmul.f32 %v731, 1.442695
        %v748 = vpow.pop %v747
        %v749 = vmul.f32 %v732, 1.442695
        %v750 = vpow.pop %v749
        %v751 = vmul.f32 %v733, 1.442695
        %v752 = vpow.pop %v751
        %v753 = vmul.f32 %v734, 1.442695
        %v754 = vpow.pop %v753
        %v755 = vmul.f32 %v735, 1.442695
        %v756 = vpow.pop %v755
        %v757 = vmul.f32 %v736, 1.442695
        %v758 = vpow.pop %v757
        %v759 = vmul.f32 %v737, 1.442695
        %v760 = vpow.pop %v759
        %v761 = vmul.f32 %v738, 1.442695
        %v762 = vpow.pop %v761
        %v763 = vmul.f32 %v739, 1.442695
        %v764 = vpow.pop %v763
        %v765 = vmul.f32 %v740, 1.442695
        %v766 = vpow.pop %v765
        %v767 = vmul.f32 %v741, 1.442695
        %v768 = vpow.pop %v767
        %v769 = vmul.f32 %v742, 1.442695
        %v770 = vpow.pop %v769
        %v771 = vmul.f32 %v743, 1.442695
        %v772 = vpow.pop %v771
        %v773 = vmul.f32 %v744, 1.442695
        %v774 = vpow.pop %v773
        %v775 = vmul.f32 %v745, 1.442695
        %v776 = vpow.pop %v775
        %v777 = vmul.f32 %v746, 1.442695
        %v778 = vpow.pop %v777
        %v779 = vsel %vm658, %v748, 0.0
        %v780 = vsel %vm658, %v750, 0.0
        %v781 = vadd.f32 %v779, %v780
        %v782 = vrot.slane %v781, 4
        %v783 = vadd.f32 %v781, %v782
        %v784 = vrot.slane %v783, 2
        %v785 = vadd.f32 %v783, %v784
        %v786 = vrot.slane %v785, 1
        %v787 = vadd.f32 %v785, %v786
        %v788 = vsel %vm658, %v752, 0.0
        %v789 = vsel %vm658, %v754, 0.0
        %v790 = vadd.f32 %v788, %v789
        %v791 = vrot.slane %v790, 4
        %v792 = vadd.f32 %v790, %v791
        %v793 = vrot.slane %v792, 2
        %v794 = vadd.f32 %v792, %v793
        %v795 = vrot.slane %v794, 1
        %v796 = vadd.f32 %v794, %v795
        %v797 = vsel %vm658, %v756, 0.0
        %v798 = vsel %vm658, %v758, 0.0
        %v799 = vadd.f32 %v797, %v798
        %v800 = vrot.slane %v799, 4
        %v801 = vadd.f32 %v799, %v800
        %v802 = vrot.slane %v801, 2
        %v803 = vadd.f32 %v801, %v802
        %v804 = vrot.slane %v803, 1
        %v805 = vadd.f32 %v803, %v804
        %v806 = vsel %vm658, %v760, 0.0
        %v807 = vsel %vm658, %v762, 0.0
        %v808 = vadd.f32 %v806, %v807
        %v809 = vrot.slane %v808, 4
        %v810 = vadd.f32 %v808, %v809
        %v811 = vrot.slane %v810, 2
        %v812 = vadd.f32 %v810, %v811
        %v813 = vrot.slane %v812, 1
        %v814 = vadd.f32 %v812, %v813
        %v815 = vsel %vm658, %v764, 0.0
        %v816 = vsel %vm658, %v766, 0.0
        %v817 = vadd.f32 %v815, %v816
        %v818 = vrot.slane %v817, 4
        %v819 = vadd.f32 %v817, %v818
        %v820 = vrot.slane %v819, 2
        %v821 = vadd.f32 %v819, %v820
        %v822 = vrot.slane %v821, 1
        %v823 = vadd.f32 %v821, %v822
        %v824 = vsel %vm658, %v768, 0.0
        %v825 = vsel %vm658, %v770, 0.0
        %v826 = vadd.f32 %v824, %v825
        %v827 = vrot.slane %v826, 4
        %v828 = vadd.f32 %v826, %v827
        %v829 = vrot.slane %v828, 2
        %v830 = vadd.f32 %v828, %v829
        %v831 = vrot.slane %v830, 1
        %v832 = vadd.f32 %v830, %v831
        %v833 = vsel %vm658, %v772, 0.0
        %v834 = vsel %vm658, %v774, 0.0
        %v835 = vadd.f32 %v833, %v834
        %v836 = vrot.slane %v835, 4
        %v837 = vadd.f32 %v835, %v836
        %v838 = vrot.slane %v837, 2
        %v839 = vadd.f32 %v837, %v838
        %v840 = vrot.slane %v839, 1
        %v841 = vadd.f32 %v839, %v840
        %v842 = vsel %vm658, %v776, 0.0
        %v843 = vsel %vm658, %v778, 0.0
        %v844 = vadd.f32 %v842, %v843
        %v845 = vrot.slane %v844, 4
        %v846 = vadd.f32 %v844, %v845
        %v847 = vrot.slane %v846, 2
        %v848 = vadd.f32 %v846, %v847
        %v849 = vrot.slane %v848, 1
        %v850 = vadd.f32 %v848, %v849
        %v851 = vrcp.pop %v787
        %v852 = vrcp.pop %v796
        %v853 = vrcp.pop %v805
        %v854 = vrcp.pop %v814
        %v855 = vrcp.pop %v823
        %v856 = vrcp.pop %v832
        %v857 = vrcp.pop %v841
        %v858 = vrcp.pop %v850
        %v859 = vmul.f32 %v748, %v851
        %v860 = vmul.f32 %v750, %v851
        %v861 = vmul.f32 %v752, %v852
        %v862 = vmul.f32 %v754, %v852
        %v863 = vmul.f32 %v756, %v853
        %v864 = vmul.f32 %v758, %v853
        %v865 = vmul.f32 %v760, %v854
        %v866 = vmul.f32 %v762, %v854
        %v867 = vmul.f32 %v764, %v855
        %v868 = vmul.f32 %v766, %v855
        %v869 = vmul.f32 %v768, %v856
        %v870 = vmul.f32 %v770, %v856
        %v871 = vmul.f32 %v772, %v857
        %v872 = vmul.f32 %v774, %v857
        %v873 = vmul.f32 %v776, %v858
        %v874 = vmul.f32 %v778, %v858
        %v875 = vld [vmem:[%s3] sm:$0xf]
        %v876 = vld [vmem:[%s3 + $0x4] sm:$0xf]
        %v877 = vld [vmem:[%s3 + $0x8] sm:$0xf]
        %v878 = vld [vmem:[%s3 + $0xc] sm:$0xf]
        %v879 = vld [vmem:[%s4] sm:$0x1]
        %v881 = vlaneseq
        %v882 = vshrl.u32 %v881, 7
        %v883 = vsub.s32 0, %v882
        %v884 = vrot.slane %v879, %v883
        %v890 = vunpack.c.l.b16 %v875
        %v891 = vunpack.c.l.b16 %v876
        %v892 = vunpack.c.l.b16 %v877
        %v893 = vunpack.c.l.b16 %v878
        %v894 = vpack.c.b16 %v891, %v890
        %v895 = vpack.c.b16 %v893, %v892
        %898 = vmatprep.subr.bf16.mxu0 0
        %899 = vmatpush1.bf16.msra.mxu0 %v894
        %900 = vmatprep.subr.bf16.mxu0 0
        %901 = vmatpush1.bf16.msra.mxu0 %v895
        %902 = vmatprep.subr.bf16.mxu0 0
        %903 = vmatpush1.bf16.msra.mxu0 0
        %904 = vmatprep.subr.bf16.mxu0 0
        %905 = vmatpush1.bf16.msra.mxu0 0
        %906 = vmatprep.subr.bf16.mxu0 0
        %907 = vmatpush1.bf16.msra.mxu0 0
        %908 = vmatprep.subr.bf16.mxu0 0
        %909 = vmatpush1.bf16.msra.mxu0 0
        %910 = vmatprep.subr.bf16.mxu0 0
        %911 = vmatpush1.bf16.msra.mxu0 0
        %912 = vmatprep.subr.bf16.mxu0 0
        %913 = vmatpush1.bf16.msra.mxu0 0
        %914 = vmatprep.subr.bf16.mxu0 0
        %915 = vmatpush1.bf16.msra.mxu0 0
        %916 = vmatprep.subr.bf16.mxu0 0
        %917 = vmatpush1.bf16.msra.mxu0 0
        %918 = vmatprep.subr.bf16.mxu0 0
        %919 = vmatpush1.bf16.msra.mxu0 0
        %920 = vmatprep.subr.bf16.mxu0 0
        %921 = vmatpush1.bf16.msra.mxu0 0
        %922 = vmatprep.subr.bf16.mxu0 0
        %923 = vmatpush1.bf16.msra.mxu0 0
        %924 = vmatprep.subr.bf16.mxu0 0
        %925 = vmatpush1.bf16.msra.mxu0 0
        %926 = vmatprep.subr.bf16.mxu0 0
        %927 = vmatpush1.bf16.msra.mxu0 0
        %928 = vmatprep.subr.bf16.mxu0 0
        %929 = vmatpush1.bf16.msra.mxu0 0
        %930 = vmatprep.mubr.bf16.mxu0 0
        %931 = vmatmul.mubr.bf16.gmra.mrb[0].mxu0 %v538
        %v932 = vpop.f32.mrb[0].mxu0
        %v933 = vadd.f32 %v884, %v932
        %v934 = vpop.f32.mrb[0].mxu0
        %v935 = vpop.f32.mrb[0].mxu0
        %v936 = vadd.f32 %v884, %v935
        %v937 = vpop.f32.mrb[0].mxu0
        %938 = vmatprep.mubr.bf16.mxu0 0
        %939 = vmatmul.mubr.bf16.gmra.mrb[0].mxu0 %v541
        %v940 = vpop.f32.mrb[0].mxu0
        %v941 = vadd.f32 %v884, %v940
        %v942 = vpop.f32.mrb[0].mxu0
        %v943 = vpop.f32.mrb[0].mxu0
        %v944 = vadd.f32 %v884, %v943
        %v945 = vpop.f32.mrb[0].mxu0
        %946 = vmatprep.mubr.bf16.mxu0 0
        %947 = vmatmul.mubr.bf16.gmra.mrb[0].mxu0 %v544
        %v948 = vpop.f32.mrb[0].mxu0
        %v949 = vadd.f32 %v884, %v948
        %v950 = vpop.f32.mrb[0].mxu0
        %v951 = vpop.f32.mrb[0].mxu0
        %v952 = vadd.f32 %v884, %v951
        %v953 = vpop.f32.mrb[0].mxu0
        %954 = vmatprep.mubr.bf16.mxu0 0
        %955 = vmatmul.mubr.bf16.gmra.mrb[0].mxu0 %v547
        %v956 = vpop.f32.mrb[0].mxu0
        %v957 = vadd.f32 %v884, %v956
        %v958 = vpop.f32.mrb[0].mxu0
        %v959 = vpop.f32.mrb[0].mxu0
        %v960 = vadd.f32 %v884, %v959
        %v961 = vpop.f32.mrb[0].mxu0
        %962 = vmatprep.mubr.bf16.mxu0 0
        %963 = vmatmul.mubr.bf16.gmra.mrb[0].mxu0 %v550
        %v964 = vpop.f32.mrb[0].mxu0
        %v965 = vadd.f32 %v884, %v964
        %v966 = vpop.f32.mrb[0].mxu0
        %v967 = vpop.f32.mrb[0].mxu0
        %v968 = vadd.f32 %v884, %v967
        %v969 = vpop.f32.mrb[0].mxu0
        %970 = vmatprep.mubr.bf16.mxu0 0
        %971 = vmatmul.mubr.bf16.gmra.mrb[0].mxu0 %v553
        %v972 = vpop.f32.mrb[0].mxu0
        %v973 = vadd.f32 %v884, %v972
        %v974 = vpop.f32.mrb[0].mxu0
        %v975 = vpop.f32.mrb[0].mxu0
        %v976 = vadd.f32 %v884, %v975
        %v977 = vpop.f32.mrb[0].mxu0
        %978 = vmatprep.mubr.bf16.mxu0 0
        %979 = vmatmul.mubr.bf16.gmra.mrb[0].mxu0 %v556
        %v980 = vpop.f32.mrb[0].mxu0
        %v981 = vadd.f32 %v884, %v980
        %v982 = vpop.f32.mrb[0].mxu0
        %v983 = vpop.f32.mrb[0].mxu0
        %v984 = vadd.f32 %v884, %v983
        %v985 = vpop.f32.mrb[0].mxu0
        %986 = vmatprep.mubr.bf16.mxu0 0
        %987 = vmatmul.mubr.bf16.gmra.mrb[0].mxu0 %v559
        %v988 = vpop.f32.mrb[0].mxu0
        %v989 = vadd.f32 %v884, %v988
        %v990 = vpop.f32.mrb[0].mxu0
        %v991 = vpop.f32.mrb[0].mxu0
        %v992 = vadd.f32 %v884, %v991
        %v993 = vpop.f32.mrb[0].mxu0
        %994 = vdwg.mxu0
        %v995 = vpack.c.bf16 %v860, %v859
        %v996 = vpack.c.bf16 %v862, %v861
        %v997 = vpack.c.bf16 %v864, %v863
        %v998 = vpack.c.bf16 %v866, %v865
        %v999 = vpack.c.bf16 %v868, %v867
        %v1000 = vpack.c.bf16 %v870, %v869
        %v1001 = vpack.c.bf16 %v872, %v871
        %v1002 = vpack.c.bf16 %v874, %v873
        %v1003 = vld [vmem:[%s5] sm:$0x3]
        %v1005 = vsel %vm658, %v995, 0
        %v1008 = vsel %vm658, %v996, 0
        %v1011 = vsel %vm658, %v997, 0
        %v1014 = vsel %vm658, %v998, 0
        %v1017 = vsel %vm658, %v999, 0
        %v1020 = vsel %vm658, %v1000, 0
        %v1023 = vsel %vm658, %v1001, 0
        %v1026 = vsel %vm658, %v1002, 0
        %vm1028 = vcmask 1041408
        %v1030 = vsel %vm1028, %v1003, 0
        %1032 = vmatprep.subr.bf16.mxu0 0
        %1033 = vmatpush1.bf16.msra.mxu0 %v1030
        %1034 = vmatprep.subr.bf16.mxu0 0
        %1035 = vmatpush1.bf16.msra.mxu0 0
        %1036 = vmatprep.subr.bf16.mxu0 0
        %1037 = vmatpush1.bf16.msra.mxu0 0
        %1038 = vmatprep.subr.bf16.mxu0 0
        %1039 = vmatpush1.bf16.msra.mxu0 0
        %1040 = vmatprep.subr.bf16.mxu0 0
        %1041 = vmatpush1.bf16.msra.mxu0 0
        %1042 = vmatprep.subr.bf16.mxu0 0
        %1043 = vmatpush1.bf16.msra.mxu0 0
        %1044 = vmatprep.subr.bf16.mxu0 0
        %1045 = vmatpush1.bf16.msra.mxu0 0
        %1046 = vmatprep.subr.bf16.mxu0 0
        %1047 = vmatpush1.bf16.msra.mxu0 0
        %1048 = vmatprep.subr.bf16.mxu0 0
        %1049 = vmatpush1.bf16.msra.mxu0 0
        %1050 = vmatprep.subr.bf16.mxu0 0
        %1051 = vmatpush1.bf16.msra.mxu0 0
        %1052 = vmatprep.subr.bf16.mxu0 0
        %1053 = vmatpush1.bf16.msra.mxu0 0
        %1054 = vmatprep.subr.bf16.mxu0 0
        %1055 = vmatpush1.bf16.msra.mxu0 0
        %1056 = vmatprep.subr.bf16.mxu0 0
        %1057 = vmatpush1.bf16.msra.mxu0 0
        %1058 = vmatprep.subr.bf16.mxu0 0
        %1059 = vmatpush1.bf16.msra.mxu0 0
        %1060 = vmatprep.subr.bf16.mxu0 0
        %1061 = vmatpush1.bf16.msra.mxu0 0
        %1062 = vmatprep.subr.bf16.mxu0 0
        %1063 = vmatpush1.bf16.msra.mxu0 0
        %1064 = vmatprep.mubr.bf16.mxu0 0
        %1065 = vmatmul.mubr.bf16.gmra.mrb[0].mxu0 %v1005
        %v1066 = vpop.f32.mrb[0].mxu0
        %v1067 = vadd.f32 0.0, %v1066
        %v1068 = vpop.f32.mrb[0].mxu0
        %v1069 = vpop.f32.mrb[0].mxu0
        %v1070 = vadd.f32 0.0, %v1069
        %v1071 = vpop.f32.mrb[0].mxu0
        %1072 = vmatprep.mubr.bf16.mxu0 0
        %1073 = vmatmul.mubr.bf16.gmra.mrb[0].mxu0 %v1008
        %v1074 = vpop.f32.mrb[0].mxu0
        %v1075 = vadd.f32 0.0, %v1074
        %v1076 = vpop.f32.mrb[0].mxu0
        %v1077 = vpop.f32.mrb[0].mxu0
        %v1078 = vadd.f32 0.0, %v1077
        %v1079 = vpop.f32.mrb[0].mxu0
        %1080 = vmatprep.mubr.bf16.mxu0 0
        %1081 = vmatmul.mubr.bf16.gmra.mrb[0].mxu0 %v1011
        %v1082 = vpop.f32.mrb[0].mxu0
        %v1083 = vadd.f32 0.0, %v1082
        %v1084 = vpop.f32.mrb[0].mxu0
        %v1085 = vpop.f32.mrb[0].mxu0
        %v1086 = vadd.f32 0.0, %v1085
        %v1087 = vpop.f32.mrb[0].mxu0
        %1088 = vmatprep.mubr.bf16.mxu0 0
        %1089 = vmatmul.mubr.bf16.gmra.mrb[0].mxu0 %v1014
        %v1090 = vpop.f32.mrb[0].mxu0
        %v1091 = vadd.f32 0.0, %v1090
        %v1092 = vpop.f32.mrb[0].mxu0
        %v1093 = vpop.f32.mrb[0].mxu0
        %v1094 = vadd.f32 0.0, %v1093
        %v1095 = vpop.f32.mrb[0].mxu0
        %1096 = vmatprep.mubr.bf16.mxu0 0
        %1097 = vmatmul.mubr.bf16.gmra.mrb[0].mxu0 %v1017
        %v1098 = vpop.f32.mrb[0].mxu0
        %v1099 = vadd.f32 0.0, %v1098
        %v1100 = vpop.f32.mrb[0].mxu0
        %v1101 = vpop.f32.mrb[0].mxu0
        %v1102 = vadd.f32 0.0, %v1101
        %v1103 = vpop.f32.mrb[0].mxu0
        %1104 = vmatprep.mubr.bf16.mxu0 0
        %1105 = vmatmul.mubr.bf16.gmra.mrb[0].mxu0 %v1020
        %v1106 = vpop.f32.mrb[0].mxu0
        %v1107 = vadd.f32 0.0, %v1106
        %v1108 = vpop.f32.mrb[0].mxu0
        %v1109 = vpop.f32.mrb[0].mxu0
        %v1110 = vadd.f32 0.0, %v1109
        %v1111 = vpop.f32.mrb[0].mxu0
        %1112 = vmatprep.mubr.bf16.mxu0 0
        %1113 = vmatmul.mubr.bf16.gmra.mrb[0].mxu0 %v1023
        %v1114 = vpop.f32.mrb[0].mxu0
        %v1115 = vadd.f32 0.0, %v1114
        %v1116 = vpop.f32.mrb[0].mxu0
        %v1117 = vpop.f32.mrb[0].mxu0
        %v1118 = vadd.f32 0.0, %v1117
        %v1119 = vpop.f32.mrb[0].mxu0
        %1120 = vmatprep.mubr.bf16.mxu0 0
        %1121 = vmatmul.mubr.bf16.gmra.mrb[0].mxu0 %v1026
        %v1122 = vpop.f32.mrb[0].mxu0
        %v1123 = vadd.f32 0.0, %v1122
        %v1124 = vpop.f32.mrb[0].mxu0
        %v1125 = vpop.f32.mrb[0].mxu0
        %v1126 = vadd.f32 0.0, %v1125
        %v1127 = vpop.f32.mrb[0].mxu0
        %1128 = vdwg.mxu0
        %v1129 = vmul.f32 %v1067, %v933
        %v1130 = vmul.f32 %v1070, %v936
        %v1131 = vmul.f32 %v1075, %v941
        %v1132 = vmul.f32 %v1078, %v944
        %v1133 = vmul.f32 %v1083, %v949
        %v1134 = vmul.f32 %v1086, %v952
        %v1135 = vmul.f32 %v1091, %v957
        %v1136 = vmul.f32 %v1094, %v960
        %v1137 = vmul.f32 %v1099, %v965
        %v1138 = vmul.f32 %v1102, %v968
        %v1139 = vmul.f32 %v1107, %v973
        %v1140 = vmul.f32 %v1110, %v976
        %v1141 = vmul.f32 %v1115, %v981
        %v1142 = vmul.f32 %v1118, %v984
        %v1143 = vmul.f32 %v1123, %v989
        %v1144 = vmul.f32 %v1126, %v992
        %v1145 = vsel %vm536, %v1129, 0.0
        %v1146 = vsel %vm536, %v1130, 0.0
        %v1147 = vadd.f32 %v1145, %v1146
        %v1148 = vrot.slane %v1147, 4
        %v1149 = vadd.f32 %v1147, %v1148
        %v1150 = vrot.slane %v1149, 2
        %v1151 = vadd.f32 %v1149, %v1150
        %v1152 = vrot.slane %v1151, 1
        %v1153 = vadd.f32 %v1151, %v1152
        %v1154 = vsel %vm536, %v1131, 0.0
        %v1155 = vsel %vm536, %v1132, 0.0
        %v1156 = vadd.f32 %v1154, %v1155
        %v1157 = vrot.slane %v1156, 4
        %v1158 = vadd.f32 %v1156, %v1157
        %v1159 = vrot.slane %v1158, 2
        %v1160 = vadd.f32 %v1158, %v1159
        %v1161 = vrot.slane %v1160, 1
        %v1162 = vadd.f32 %v1160, %v1161
        %v1163 = vsel %vm536, %v1133, 0.0
        %v1164 = vsel %vm536, %v1134, 0.0
        %v1165 = vadd.f32 %v1163, %v1164
        %v1166 = vrot.slane %v1165, 4
        %v1167 = vadd.f32 %v1165, %v1166
        %v1168 = vrot.slane %v1167, 2
        %v1169 = vadd.f32 %v1167, %v1168
        %v1170 = vrot.slane %v1169, 1
        %v1171 = vadd.f32 %v1169, %v1170
        %v1172 = vsel %vm536, %v1135, 0.0
        %v1173 = vsel %vm536, %v1136, 0.0
        %v1174 = vadd.f32 %v1172, %v1173
        %v1175 = vrot.slane %v1174, 4
        %v1176 = vadd.f32 %v1174, %v1175
        %v1177 = vrot.slane %v1176, 2
        %v1178 = vadd.f32 %v1176, %v1177
        %v1179 = vrot.slane %v1178, 1
        %v1180 = vadd.f32 %v1178, %v1179
        %v1181 = vsel %vm536, %v1137, 0.0
        %v1182 = vsel %vm536, %v1138, 0.0
        %v1183 = vadd.f32 %v1181, %v1182
        %v1184 = vrot.slane %v1183, 4
        %v1185 = vadd.f32 %v1183, %v1184
        %v1186 = vrot.slane %v1185, 2
        %v1187 = vadd.f32 %v1185, %v1186
        %v1188 = vrot.slane %v1187, 1
        %v1189 = vadd.f32 %v1187, %v1188
        %v1190 = vsel %vm536, %v1139, 0.0
        %v1191 = vsel %vm536, %v1140, 0.0
        %v1192 = vadd.f32 %v1190, %v1191
        %v1193 = vrot.slane %v1192, 4
        %v1194 = vadd.f32 %v1192, %v1193
        %v1195 = vrot.slane %v1194, 2
        %v1196 = vadd.f32 %v1194, %v1195
        %v1197 = vrot.slane %v1196, 1
        %v1198 = vadd.f32 %v1196, %v1197
        %v1199 = vsel %vm536, %v1141, 0.0
        %v1200 = vsel %vm536, %v1142, 0.0
        %v1201 = vadd.f32 %v1199, %v1200
        %v1202 = vrot.slane %v1201, 4
        %v1203 = vadd.f32 %v1201, %v1202
        %v1204 = vrot.slane %v1203, 2
        %v1205 = vadd.f32 %v1203, %v1204
        %v1206 = vrot.slane %v1205, 1
        %v1207 = vadd.f32 %v1205, %v1206
        %v1208 = vsel %vm536, %v1143, 0.0
        %v1209 = vsel %vm536, %v1144, 0.0
        %v1210 = vadd.f32 %v1208, %v1209
        %v1211 = vrot.slane %v1210, 4
        %v1212 = vadd.f32 %v1210, %v1211
        %v1213 = vrot.slane %v1212, 2
        %v1214 = vadd.f32 %v1212, %v1213
        %v1215 = vrot.slane %v1214, 1
        %v1216 = vadd.f32 %v1214, %v1215
        %v1217 = vpack.c.bf16 %v1153, %v1153
        %v1218 = vpack.c.bf16 %v1162, %v1162
        %v1219 = vpack.c.bf16 %v1171, %v1171
        %v1220 = vpack.c.bf16 %v1180, %v1180
        %v1221 = vpack.c.bf16 %v1189, %v1189
        %v1222 = vpack.c.bf16 %v1198, %v1198
        %v1223 = vpack.c.bf16 %v1207, %v1207
        %v1224 = vpack.c.bf16 %v1216, %v1216
        %v1225 = vld [vmem:[%s6] sm:$0xf]
        %v1226 = vld [vmem:[%s6 + $0x4] sm:$0xf]
        %v1227 = vld [vmem:[%s6 + $0x8] sm:$0xf]
        %v1228 = vld [vmem:[%s6 + $0xc] sm:$0xf]
        %v1229 = vld [vmem:[%s7] sm:$0x1]
        %v1231 = vlaneseq
        %v1232 = vshrl.u32 %v1231, 7
        %v1233 = vsub.s32 0, %v1232
        %v1234 = vrot.slane %v1229, %v1233
        %v1244 = vunpack.c.l.b16 %v1217
        %v1245 = vunpack.c.l.b16 %v1218
        %v1246 = vunpack.c.l.b16 %v1219
        %v1247 = vunpack.c.l.b16 %v1220
        %v1248 = vunpack.c.l.b16 %v1221
        %v1249 = vunpack.c.l.b16 %v1222
        %v1250 = vunpack.c.l.b16 %v1223
        %v1251 = vunpack.c.l.b16 %v1224
        %vm1252 = vcmask 1041409
        %v1253 = vsel %vm1252, %v1245, %v1244
        %vm1254 = vcmask 1042434
        %v1255 = vsel %vm1254, %v1246, %v1253
        %vm1256 = vcmask 1043459
        %v1257 = vsel %vm1256, %v1247, %v1255
        %vm1258 = vcmask 1044484
        %v1259 = vsel %vm1258, %v1248, %v1257
        %vm1260 = vcmask 1045509
        %v1261 = vsel %vm1260, %v1249, %v1259
        %vm1262 = vcmask 1046534
        %v1263 = vsel %vm1262, %v1250, %v1261
        %vm1264 = vcmask 1047559
        %v1265 = vsel %vm1264, %v1251, %v1263
        %v1266 = vpack.c.b16 %v1265, %v1265
        %v1271 = vunpack.c.l.b16 %v1225
        %v1272 = vunpack.c.l.b16 %v1226
        %v1273 = vunpack.c.l.b16 %v1227
        %v1274 = vunpack.c.l.b16 %v1228
        %v1275 = vpack.c.b16 %v1272, %v1271
        %v1276 = vpack.c.b16 %v1274, %v1273
        %v1280 = vsel %vm536, %v1266, 0
        %1282 = vmatprep.subr.bf16.mxu0 0
        %1283 = vmatpush1.bf16.msra.mxu0 %v1275
        %1284 = vmatprep.subr.bf16.mxu0 0
        %1285 = vmatpush1.bf16.msra.mxu0 %v1276
        %1286 = vmatprep.subr.bf16.mxu0 0
        %1287 = vmatpush1.bf16.msra.mxu0 0
        %1288 = vmatprep.subr.bf16.mxu0 0
        %1289 = vmatpush1.bf16.msra.mxu0 0
        %1290 = vmatprep.subr.bf16.mxu0 0
        %1291 = vmatpush1.bf16.msra.mxu0 0
        %1292 = vmatprep.subr.bf16.mxu0 0
        %1293 = vmatpush1.bf16.msra.mxu0 0
        %1294 = vmatprep.subr.bf16.mxu0 0
        %1295 = vmatpush1.bf16.msra.mxu0 0
        %1296 = vmatprep.subr.bf16.mxu0 0
        %1297 = vmatpush1.bf16.msra.mxu0 0
        %1298 = vmatprep.subr.bf16.mxu0 0
        %1299 = vmatpush1.bf16.msra.mxu0 0
        %1300 = vmatprep.subr.bf16.mxu0 0
        %1301 = vmatpush1.bf16.msra.mxu0 0
        %1302 = vmatprep.subr.bf16.mxu0 0
        %1303 = vmatpush1.bf16.msra.mxu0 0
        %1304 = vmatprep.subr.bf16.mxu0 0
        %1305 = vmatpush1.bf16.msra.mxu0 0
        %1306 = vmatprep.subr.bf16.mxu0 0
        %1307 = vmatpush1.bf16.msra.mxu0 0
        %1308 = vmatprep.subr.bf16.mxu0 0
        %1309 = vmatpush1.bf16.msra.mxu0 0
        %1310 = vmatprep.subr.bf16.mxu0 0
        %1311 = vmatpush1.bf16.msra.mxu0 0
        %1312 = vmatprep.subr.bf16.mxu0 0
        %1313 = vmatpush1.bf16.msra.mxu0 0
        %1314 = vmatprep.mubr.bf16.mxu0 0
        %1315 = vmatmul.mubr.bf16.gmra.mrb[0].mxu0 %v1280
        %v1316 = vpop.f32.mrb[0].mxu0
        %v1317 = vadd.f32 %v1234, %v1316
        %v1318 = vpop.f32.mrb[0].mxu0
        %v1319 = vpop.f32.mrb[0].mxu0
        %v1320 = vpop.f32.mrb[0].mxu0
        %1321 = vdwg.mxu0
        %v1322 = vsel %vm536, %v1317, 0.0
        %1323 = vadd.xlane.f32.xlu0 %v1322
        %v1324 = vpop.xlane.xlu0 %1323
        %v1325 = vrcp.pop 32.0
        %v1326 = vmul.f32 %v1324, %v1325
        %v1327 = vsub.f32 %v1317, %v1326
        %v1328 = vmul.f32 %v1327, %v1327
        %v1329 = vsel %vm536, %v1328, 0.0
        %1330 = vadd.xlane.f32.xlu0 %v1329
        %v1331 = vpop.xlane.xlu0 %1330
        %v1332 = vmul.f32 %v1331, %v1325
        %v1333 = vadd.f32 %v1332, 1e-06
        %v1334 = vrsqrt.pop %v1333
        %v1335 = vmul.f32 %v1327, %v1334
        %v1336 = vld [vmem:[%s8] sm:$0x1]
        %v1338 = vlaneseq
        %v1339 = vshrl.u32 %v1338, 7
        %v1340 = vsub.s32 0, %v1339
        %v1341 = vrot.slane %v1336, %v1340
        %v1343 = vmul.f32 %v1335, %v1341
        %v1344 = vld [vmem:[%s9] sm:$0x1]
        %v1346 = vlaneseq
        %v1347 = vshrl.u32 %v1346, 7
        %v1348 = vsub.s32 0, %v1347
        %v1349 = vrot.slane %v1344, %v1348
        %v1351 = vadd.f32 %v1343, %v1349
        %v1352 = vpack.c.bf16 %v1351, %v1351
        %v1353 = vld [vmem:[%s10] sm:$0xf]
        %v1354 = vld [vmem:[%s10 + $0x4] sm:$0xf]
        %v1355 = vld [vmem:[%s10 + $0x8] sm:$0xf]
        %v1356 = vld [vmem:[%s10 + $0xc] sm:$0xf]
        %v1357 = vld [vmem:[%s11] sm:$0x1]
        %v1359 = vlaneseq
        %v1360 = vshrl.u32 %v1359, 7
        %v1361 = vsub.s32 0, %v1360
        %v1362 = vrot.slane %v1357, %v1361
        %v1368 = vunpack.c.l.b16 %v1353
        %v1369 = vunpack.c.l.b16 %v1354
        %v1370 = vunpack.c.l.b16 %v1355
        %v1371 = vunpack.c.l.b16 %v1356
        %v1372 = vpack.c.b16 %v1369, %v1368
        %v1373 = vpack.c.b16 %v1371, %v1370
        %v1377 = vsel %vm536, %v1352, 0
        %1379 = vmatprep.subr.bf16.mxu0 0
        %1380 = vmatpush1.bf16.msra.mxu0 %v1372
        %1381 = vmatprep.subr.bf16.mxu0 0
        %1382 = vmatpush1.bf16.msra.mxu0 %v1373
        %1383 = vmatprep.subr.bf16.mxu0 0
        %1384 = vmatpush1.bf16.msra.mxu0 0
        %1385 = vmatprep.subr.bf16.mxu0 0
        %1386 = vmatpush1.bf16.msra.mxu0 0
        %1387 = vmatprep.subr.bf16.mxu0 0
        %1388 = vmatpush1.bf16.msra.mxu0 0
        %1389 = vmatprep.subr.bf16.mxu0 0
        %1390 = vmatpush1.bf16.msra.mxu0 0
        %1391 = vmatprep.subr.bf16.mxu0 0
        %1392 = vmatpush1.bf16.msra.mxu0 0
        %1393 = vmatprep.subr.bf16.mxu0 0
        %1394 = vmatpush1.bf16.msra.mxu0 0
        %1395 = vmatprep.subr.bf16.mxu0 0
        %1396 = vmatpush1.bf16.msra.mxu0 0
        %1397 = vmatprep.subr.bf16.mxu0 0
        %1398 = vmatpush1.bf16.msra.mxu0 0
        %1399 = vmatprep.subr.bf16.mxu0 0
        %1400 = vmatpush1.bf16.msra.mxu0 0
        %1401 = vmatprep.subr.bf16.mxu0 0
        %1402 = vmatpush1.bf16.msra.mxu0 0
        %1403 = vmatprep.subr.bf16.mxu0 0
        %1404 = vmatpush1.bf16.msra.mxu0 0
        %1405 = vmatprep.subr.bf16.mxu0 0
        %1406 = vmatpush1.bf16.msra.mxu0 0
        %1407 = vmatprep.subr.bf16.mxu0 0
        %1408 = vmatpush1.bf16.msra.mxu0 0
        %1409 = vmatprep.subr.bf16.mxu0 0
        %1410 = vmatpush1.bf16.msra.mxu0 0
        %1411 = vmatprep.mubr.bf16.mxu0 0
        %1412 = vmatmul.mubr.bf16.gmra.mrb[0].mxu0 %v1377
        %v1413 = vpop.f32.mrb[0].mxu0
        %v1414 = vadd.f32 %v1362, %v1413
        %v1415 = vpop.f32.mrb[0].mxu0
        %v1416 = vpop.f32.mrb[0].mxu0
        %v1417 = vpop.f32.mrb[0].mxu0
        %1418 = vdwg.mxu0
        %v1419 = vmul.f32 %v1414, 0.5
        %v1420 = vmul.f32 %v1414, 0.044715
        %v1421 = vmul.f32 %v1420, %v1414
        %v1422 = vmul.f32 %v1421, %v1414
        %v1423 = vadd.f32 %v1414, %v1422
        %v1424 = vmul.f32 %v1423, 0.7978846
        %v1425 = vtanh.pop %v1424
        %v1426 = vadd.f32 %v1425, 1.0
        %v1427 = vmul.f32 %v1419, %v1426
        %v1428 = vpack.c.bf16 %v1427, %v1427
        %v1429 = vld [vmem:[%s12] sm:$0xf]
        %v1430 = vld [vmem:[%s12 + $0x4] sm:$0xf]
        %v1431 = vld [vmem:[%s12 + $0x8] sm:$0xf]
        %v1432 = vld [vmem:[%s12 + $0xc] sm:$0xf]
        %v1433 = vld [vmem:[%s12 + $0x10] sm:$0xf]
        %v1434 = vld [vmem:[%s12 + $0x14] sm:$0xf]
        %v1435 = vld [vmem:[%s12 + $0x18] sm:$0xf]
        %v1436 = vld [vmem:[%s12 + $0x1c] sm:$0xf]
        %v1437 = vld [vmem:[%s13] sm:$0x1]
        %v1439 = vlaneseq
        %v1440 = vshrl.u32 %v1439, 7
        %v1441 = vsub.s32 0, %v1440
        %v1442 = vrot.slane %v1437, %v1441
        %v1452 = vunpack.c.l.b16 %v1429
        %v1453 = vunpack.c.l.b16 %v1430
        %v1454 = vunpack.c.l.b16 %v1431
        %v1455 = vunpack.c.l.b16 %v1432
        %v1456 = vunpack.c.l.b16 %v1433
        %v1457 = vunpack.c.l.b16 %v1434
        %v1458 = vunpack.c.l.b16 %v1435
        %v1459 = vunpack.c.l.b16 %v1436
        %v1460 = vpack.c.b16 %v1453, %v1452
        %v1461 = vpack.c.b16 %v1455, %v1454
        %v1462 = vpack.c.b16 %v1457, %v1456
        %v1463 = vpack.c.b16 %v1459, %v1458
        %vm1468 = vcmask 523264
        %v1470 = vsel %vm1468, %v1428, 0
        %1472 = vmatprep.subr.bf16.mxu0 0
        %1473 = vmatpush1.bf16.msra.mxu0 %v1460
        %1474 = vmatprep.subr.bf16.mxu0 0
        %1475 = vmatpush1.bf16.msra.mxu0 %v1461
        %1476 = vmatprep.subr.bf16.mxu0 0
        %1477 = vmatpush1.bf16.msra.mxu0 %v1462
        %1478 = vmatprep.subr.bf16.mxu0 0
        %1479 = vmatpush1.bf16.msra.mxu0 %v1463
        %1480 = vmatprep.subr.bf16.mxu0 0
        %1481 = vmatpush1.bf16.msra.mxu0 0
        %1482 = vmatprep.subr.bf16.mxu0 0
        %1483 = vmatpush1.bf16.msra.mxu0 0
        %1484 = vmatprep.subr.bf16.mxu0 0
        %1485 = vmatpush1.bf16.msra.mxu0 0
        %1486 = vmatprep.subr.bf16.mxu0 0
        %1487 = vmatpush1.bf16.msra.mxu0 0
        %1488 = vmatprep.subr.bf16.mxu0 0
        %1489 = vmatpush1.bf16.msra.mxu0 0
        %1490 = vmatprep.subr.bf16.mxu0 0
        %1491 = vmatpush1.bf16.msra.mxu0 0
        %1492 = vmatprep.subr.bf16.mxu0 0
        %1493 = vmatpush1.bf16.msra.mxu0 0
        %1494 = vmatprep.subr.bf16.mxu0 0
        %1495 = vmatpush1.bf16.msra.mxu0 0
        %1496 = vmatprep.subr.bf16.mxu0 0
        %1497 = vmatpush1.bf16.msra.mxu0 0
        %1498 = vmatprep.subr.bf16.mxu0 0
        %1499 = vmatpush1.bf16.msra.mxu0 0
        %1500 = vmatprep.subr.bf16.mxu0 0
        %1501 = vmatpush1.bf16.msra.mxu0 0
        %1502 = vmatprep.subr.bf16.mxu0 0
        %1503 = vmatpush1.bf16.msra.mxu0 0
        %1504 = vmatprep.mubr.bf16.mxu0 0
        %1505 = vmatmul.mubr.bf16.gmra.mrb[0].mxu0 %v1470
        %v1506 = vpop.f32.mrb[0].mxu0
        %v1507 = vadd.f32 %v1442, %v1506
        %v1508 = vpop.f32.mrb[0].mxu0
        %v1509 = vpop.f32.mrb[0].mxu0
        %v1510 = vpop.f32.mrb[0].mxu0
        %1511 = vdwg.mxu0
        %v1512 = vadd.f32 %v1317, %v1507
        %1513 = vst.msk [vmem:[%s486] sm:$0xff] %vm536, %v1512
        %s1514 = sand.u32 %s338, 1
        %s1515 = scalar_lea.sflag [#allocation4], %s1514
        %s1516 = sand.u32 %s338, 1
        %s1517 = smul.addr %s1516, 8
        %s1518 = scalar_lea.vmem [#allocation5], %s1517
        // Predicated region
        $region81: #{tpu_custom_call.1} parent=75 // pred_check
          %p1519 = pneg %p348
        $region82: #{tpu_custom_call.1} parent=75 // pred_check_branch
          %1521 = sbr.rel (%p1519) target = $region84
        $region83: #{tpu_custom_call.1} parent=75 // pred_region
          %s1523 = ssub.s32 128, 128
          %1524 = vsyncadd %s1515, %s1523
          %s1525 = smul.addr %s31, 128
          %s1526 = scalar_lea.hbm %s14, %s1525
          %s1528 = sshll.u32 %s1518, 4
          %s1529 = int_to_ptr.vmem [resolvable:$true] %s1528
          %1531 = dma.vmem_to_hbm [thread:$0]  %s1529, 128, %s1526, %s1515
        $region84: #{tpu_custom_call.1} parent=75 // pred_fallthru
          _
      $region76: #{tpu_custom_call.1} parent=5 // pred_fallthru
        _
      %p1532 = scmp.le.s32.totalorder 2, %s26
      // Predicated region
      $region85: #{tpu_custom_call.1} parent=5 // pred_check
        %p1533 = pneg %p1532
      $region86: #{tpu_custom_call.1} parent=5 // pred_check_branch
        %1535 = sbr.rel (%p1533) target = $region88
      $region87: #{tpu_custom_call.1} parent=5 // pred_region
        %s1536 = ssub.s32 %s26, 2
        // Predicated region
        $region89: #{tpu_custom_call.1} parent=87 // pred_check
          %p1537 = pneg %p354
        $region90: #{tpu_custom_call.1} parent=87 // pred_check_branch
          %1539 = sbr.rel (%p1537) target = $region92
        $region91: #{tpu_custom_call.1} parent=87 // pred_region
          %s1540 = sand.u32 %s339, 1
          %s1541 = scalar_lea.sflag [#allocation4], %s1540
          %s1542 = sand.u32 %s339, 1
          %s1543 = smul.addr %s1542, 8
          %s1544 = scalar_lea.vmem [#allocation5], %s1543
          %1545 = dma.done %s1541, 128
        $region92: #{tpu_custom_call.1} parent=87 // pred_fallthru
          _
      $region88: #{tpu_custom_call.1} parent=5 // pred_fallthru
        _
    $region6: #{tpu_custom_call.1} parent=1 // loop_footer
      %s30 = sadd.s32 1, %s26
    $region7: #{tpu_custom_call.1} parent=1 // loop_footer_branch
      %25 = sbr.rel target = $region3
    $region8: #{tpu_custom_call.1} parent=1 // loop_exit
      _
    %1546 = vsyncpa [#allocation3], 1
    %s1547 = scalar_lea.sflag [#allocation3], 1
    %1548 = vsyncpa %s1547, 1
    %1549 = vsyncpa [#allocation4], 1
    %s1550 = scalar_lea.sflag [#allocation4], 1
    %1551 = vsyncpa %s1550, 1

</llo_original>
